<compile_context>
chip_gen: v6e
topology: v6e:2x2x1
jax: 0.10.0
libtpu: 0.0.40
codegen_flags: <defaults>
</compile_context>

<pallas_src>
import jax
import jax.numpy as jnp
from jax import lax
from jax.experimental import pallas as pl
from jax.experimental.pallas import tpu as pltpu


# ---------------- config (small, consistent with the module) ----------------
B = 2            # batch
T = 8            # sequence length
N_EMBD = 32      # config.n_embd
PROJ = 32        # config.proj_size
NUM_HEADS = 4    # config.num_heads
HEAD_DIM = PROJ // NUM_HEADS
D_MODEL = 32     # config.d_model -> MLP hidden = 4*d_model = 128
HIDDEN = 4 * D_MODEL
LN_EPS = 1e-5

BT = B * T                 # 16 flattened rows
HT = NUM_HEADS * T         # 32 = all-heads score width (per batch)
BHT = B * HT               # 64 = all-batch all-head score width
OUT_W = N_EMBD + HT        # 64 packed output lanes [y | attn_weights]
NEG_BIG = -1e9


def _layernorm(x, gamma, beta):
    # x: (rows, C), gamma/beta: (1, C). Matches torch.nn.LayerNorm over last dim.
    mu = jnp.mean(x, axis=-1, keepdims=True)
    var = jnp.mean((x - mu) ** 2, axis=-1, keepdims=True)
    return (x - mu) * lax.rsqrt(var + LN_EPS) * gamma + beta


def encoder_block_kernel(x_ref, w_ref, w2_ref, pv_ref, c_ref, out_ref):
    # Single grid step: everything (<200 KB) is VMEM-resident at once.
    x = x_ref[...]                                # (BT, N_EMBD) f32
    W = w_ref[...]                                # (160, 128) sublane-stacked weights
    pv = pv_ref[...]                              # (16, 128) biases / LN vectors
    C = c_ref[...]                                # (288, 64) precomputed constants

    # ---- sublane-aligned weight slices (lane offset 0 everywhere) ----
    w1 = W[0:32, :]                               # (32, 128)
    wq = W[32:64, 0:PROJ]                         # (32, 32)  pre-scaled by 1/sqrt(D)
    wk = W[64:96, 0:PROJ]
    wv = W[96:128, 0:PROJ]
    wp = W[128:160, 0:N_EMBD]

    b1 = pv[0:1, 0:HIDDEN]                        # (1, 128)
    bq = pv[1:2, 0:PROJ]                          # pre-scaled by 1/sqrt(D)
    bk = pv[2:3, 0:PROJ]
    bv = pv[3:4, 0:PROJ]
    bp = pv[4:5, 0:N_EMBD]
    b2 = pv[5:6, 0:N_EMBD]
    ln1g = pv[6:7, 0:N_EMBD]
    ln1b = pv[7:8, 0:N_EMBD]
    ln2g = pv[8:9, 0:N_EMBD]
    ln2b = pv[9:10, 0:N_EMBD]

    # ---- precomputed constants (hoisted host-side) ----
    gsum = C[0:64, :]                             # (64, 64) per-(batch,head) group sum
    R = C[64:128, 0:BT]                           # (64, 16) row-replication matrix
    blkm = C[128:192, 0:PROJ]                     # (64, 32) block-diag head mask
    fold = C[192:256, 0:HT]                       # (64, 32) attention-weight extractor
    xm_one = C[256:272, :]                        # (16, 64) 1.0 at cross-batch cols
    xm_neg = C[272:288, :]                        # (16, 64) -1e9 at cross-batch cols

    # ---- projections (scale folded into wq/bq; replication on the idle MXU) ----
    q = jnp.dot(x, wq, preferred_element_type=jnp.float32) + bq          # (16, 32)
    x_rep = jnp.dot(R, x, preferred_element_type=jnp.float32)            # (64, 32)
    k_blk = (jnp.dot(x_rep, wk, preferred_element_type=jnp.float32) + bk) * blkm
    v_blk = (jnp.dot(x_rep, wv, preferred_element_type=jnp.float32) + bv) * blkm

    # ---- all-batch, all-head scores in one lane-dense (16, 64) NT matmul ----
    nt_dims = (((1,), (1,)), ((), ()))            # A @ B^T
    s = lax.dot_general(q, k_blk, nt_dims, preferred_element_type=jnp.float32)
    s = s + xm_neg                                # kill cross-batch columns (exp -> 0)
    # Per-(batch,head) softmax; subtracting the row max (a per-row constant >= every
    # per-block max) leaves each block's softmax unchanged and keeps it stable.
    e = jnp.exp(s - jnp.max(s, axis=-1, keepdims=True))                  # (16, 64)
    denom = jnp.dot(e, gsum, preferred_element_type=jnp.float32) + xm_one
    att = e / denom                               # exact division (matches torch)

    # att @ V_blk directly yields the concatenated (16, PROJ) head layout;
    # att @ fold collapses the zeroed cross-batch blocks into (B*T, H*T) weights.
    y_heads = jnp.dot(att, v_blk, preferred_element_type=jnp.float32)    # (16, 32)
    aw = jnp.dot(att, fold, preferred_element_type=jnp.float32)          # (16, 32)
    out_ref[:, N_EMBD:OUT_W] = aw

    # ---- output projection + residual + ln1 ----
    attn_logits = jnp.dot(y_heads, wp, preferred_element_type=jnp.float32) + bp
    h1 = _layernorm(x + attn_logits, ln1g, ln1b)

    # ---- MLP: Linear -> GELU(exact erf, matches torch nn.GELU()) -> Linear ----
    m = jnp.dot(h1, w1, preferred_element_type=jnp.float32) + b1
    m = 0.5 * m * (1.0 + lax.erf(m * (1.0 / 2.0 ** 0.5)))
    m = jnp.dot(m, w2_ref[...], preferred_element_type=jnp.float32) + b2

    # ---- x = h1 + ln2(h1 + mlp(h1)) ----
    out_ref[:, 0:N_EMBD] = h1 + _layernorm(h1 + m, ln2g, ln2b)


def _build_constants():
    f32 = jnp.float32
    rows = jnp.arange(BHT)
    # R: replication matrix, row (b*H + h)*T + t -> source row b*T + t.
    tgt = (rows // HT) * T + (rows % T)
    R = (tgt[:, None] == jnp.arange(BT)[None, :]).astype(f32)            # (64, 16)
    # Block-diagonal head mask: keep only head-h channels on head-h rows.
    rhead = (rows // T) % NUM_HEADS
    blkm = (rhead[:, None] == (jnp.arange(PROJ)[None, :] // HEAD_DIM)).astype(f32)
    # Group-sum matrix: sum within each T-wide (batch, head) column block.
    g = rows // T
    gsum = (g[:, None] == g[None, :]).astype(f32)                        # (64, 64)
    # Fold matrix: (B*T, B*H*T) att -> (B*T, H*T) weights (cross-batch cols are 0).
    fold = ((rows % HT)[:, None] == jnp.arange(HT)[None, :]).astype(f32)  # (64, 32)
    # Cross-batch masks over the (16, 64) score tile.
    rb = jnp.arange(BT) // T
    cb = jnp.arange(BHT) // HT
    xm = (rb[:, None] != cb[None, :]).astype(f32)                        # (16, 64)

    def pad_lanes(a):
        return jnp.pad(a, ((0, 0), (0, BHT - a.shape[1])))

    return jnp.concatenate(
        [gsum, pad_lanes(R), pad_lanes(blkm), pad_lanes(fold), xm, xm * NEG_BIG],
        axis=0)                                                          # (288, 64)


def encoder_block(x, params):
    (wq, bq, wk, bk, wv, bv, wp, bp,
     ln1g, ln1b, ln2g, ln2b, w1, b1, w2, b2) = params

    # ---- host-side parameter packing (pure XLA, negligible cost) ----
    scale = 1.0 / (HEAD_DIM ** 0.5)

    def pad_w(w):                                  # pad weight block to 128 lanes
        return jnp.pad(w, ((0, 0), (0, 128 - w.shape[1])))

    Wbuf = jnp.concatenate(
        [w1, pad_w(wq * scale), pad_w(wk), pad_w(wv), pad_w(wp)], axis=0)  # (160, 128)

    def pad_row(vec):
        vec = vec.reshape(1, -1)
        return jnp.pad(vec, ((0, 0), (0, 128 - vec.shape[1])))

    pvbuf = jnp.concatenate(
        [pad_row(b1), pad_row(bq * scale), pad_row(bk), pad_row(bv),
         pad_row(bp), pad_row(b2), pad_row(ln1g), pad_row(ln1b),
         pad_row(ln2g), pad_row(ln2b), jnp.zeros((6, 128), jnp.float32)],
        axis=0)                                                            # (16, 128)

    cst = _build_constants()                                               # (288, 64)
    x2 = x.reshape(BT, N_EMBD)

    out = pl.pallas_call(
        encoder_block_kernel,
        out_shape=jax.ShapeDtypeStruct((BT, OUT_W), jnp.float32),
        grid_spec=pltpu.PrefetchScalarGridSpec(
            num_scalar_prefetch=0,
            grid=(1,),                                    # collapsed batch grid
            in_specs=[
                pl.BlockSpec((BT, N_EMBD), lambda i: (0, 0)),
                pl.BlockSpec((160, 128), lambda i: (0, 0)),
                pl.BlockSpec((HIDDEN, N_EMBD), lambda i: (0, 0)),
                pl.BlockSpec((16, 128), lambda i: (0, 0)),
                pl.BlockSpec((288, BHT), lambda i: (0, 0)),
            ],
            out_specs=pl.BlockSpec((BT, OUT_W), lambda i: (0, 0)),
        ),
        compiler_params=pltpu.CompilerParams(
            dimension_semantics=("arbitrary",)),
    )(x2, Wbuf, w2, pvbuf, cst)

    y = out[:, 0:N_EMBD].reshape(B, T, N_EMBD)
    # (B*T, H*T) lane-dense layout -> module's (B, H, T, T) layout (cheap XLA reshape).
    attn_weights = out[:, N_EMBD:OUT_W].reshape(B, T, NUM_HEADS, T).transpose(0, 2, 1, 3)
    return y, attn_weights


# ---------------- pure-JAX reference for verification ----------------
def encoder_block_ref(x, params):
    (wq, bq, wk, bk, wv, bv, wp, bp,
     ln1g, ln1b, ln2g, ln2b, w1, b1, w2, b2) = params

    def ln(z, g, be):
        mu = jnp.mean(z, axis=-1, keepdims=True)
        var = jnp.mean((z - mu) ** 2, axis=-1, keepdims=True)
        return (z - mu) / jnp.sqrt(var + LN_EPS) * g + be

    q = x @ wq + bq
    k = x @ wk + bk
    v = x @ wv + bv
    q = q.reshape(B, T, NUM_HEADS, HEAD_DIM).transpose(0, 2, 1, 3)
    k = k.reshape(B, T, NUM_HEADS, HEAD_DIM).transpose(0, 2, 1, 3)
    v = v.reshape(B, T, NUM_HEADS, HEAD_DIM).transpose(0, 2, 1, 3)
    att = jnp.einsum("bhqd,bhkd->bhqk", q, k) * (1.0 / HEAD_DIM ** 0.5)
    att_w = jax.nn.softmax(att, axis=-1)
    y = jnp.einsum("bhqk,bhkd->bhqd", att_w, v)
    y = y.transpose(0, 2, 1, 3).reshape(B, T, PROJ)
    attn_logits = y @ wp + bp
    h1 = ln(x + attn_logits, ln1g, ln1b)
    m = h1 @ w1 + b1
    m = 0.5 * m * (1.0 + lax.erf(m / jnp.sqrt(2.0)))
    m = m @ w2 + b2
    out = h1 + ln(h1 + m, ln2g, ln2b)
    return out, att_w


def make_params(key):
    ks = jax.random.split(key, 16)
    s = 0.02
    wq = s * jax.random.normal(ks[0], (N_EMBD, PROJ), jnp.float32)
    bq = s * jax.random.normal(ks[1], (1, PROJ), jnp.float32)
    wk = s * jax.random.normal(ks[2], (N_EMBD, PROJ), jnp.float32)
    bk = s * jax.random.normal(ks[3], (1, PROJ), jnp.float32)
    wv = s * jax.random.normal(ks[4], (N_EMBD, PROJ), jnp.float32)
    bv = s * jax.random.normal(ks[5], (1, PROJ), jnp.float32)
    wp = s * jax.random.normal(ks[6], (PROJ, N_EMBD), jnp.float32)
    bp = s * jax.random.normal(ks[7], (1, N_EMBD), jnp.float32)
    ln1g = jnp.ones((1, N_EMBD), jnp.float32)
    ln1b = jnp.zeros((1, N_EMBD), jnp.float32)
    ln2g = jnp.ones((1, N_EMBD), jnp.float32)
    ln2b = jnp.zeros((1, N_EMBD), jnp.float32)
    w1 = s * jax.random.normal(ks[8], (N_EMBD, HIDDEN), jnp.float32)
    b1 = s * jax.random.normal(ks[9], (1, HIDDEN), jnp.float32)
    w2 = s * jax.random.normal(ks[10], (HIDDEN, N_EMBD), jnp.float32)
    b2 = s * jax.random.normal(ks[11], (1, N_EMBD), jnp.float32)
    return (wq, bq, wk, bk, wv, bv, wp, bp,
            ln1g, ln1b, ln2g, ln2b, w1, b1, w2, b2)


if __name__ == "__main__":
    key = jax.random.PRNGKey(0)
    kx, kp = jax.random.split(key)
    x = jax.random.normal(kx, (B, T, N_EMBD), jnp.float32)
    params = make_params(kp)

    y, attw = encoder_block(x, params)
    jax.block_until_ready((y, attw))

    y_ref, attw_ref = encoder_block_ref(x, params)
    assert jnp.allclose(y, y_ref, atol=1e-4, rtol=1e-4), "output mismatch"
    assert jnp.allclose(attw, attw_ref, atol=1e-4, rtol=1e-4), "attn weights mismatch"

    print("KERNEL_OK")
</pallas_src>

<mosaic_0001>
module attributes {stable_mosaic.version = 11 : i64} {
  func.func @encoder_block_kernel(%arg0: i32, %arg1: memref<16x32xf32, #tpu.memory_space<vmem>>, %arg2: memref<160x128xf32, #tpu.memory_space<vmem>>, %arg3: memref<128x32xf32, #tpu.memory_space<vmem>>, %arg4: memref<16x128xf32, #tpu.memory_space<vmem>>, %arg5: memref<288x64xf32, #tpu.memory_space<vmem>>, %arg6: memref<16x64xf32, #tpu.memory_space<vmem>>) attributes {dimension_semantics = [#tpu.dimension_semantics<arbitrary>], iteration_bounds = array<i64: 1>, scalar_prefetch = 0 : i64, scratch_operands = 0 : i64, tpu.core_type = #tpu.core_type<tc>, window_params = [{pipeline_mode = #tpu.pipeline_mode<synchronous>, transform_indices = @transform_0, window_bounds = array<i64: 16, 32>}, {pipeline_mode = #tpu.pipeline_mode<synchronous>, transform_indices = @transform_1, window_bounds = array<i64: 160, 128>}, {pipeline_mode = #tpu.pipeline_mode<synchronous>, transform_indices = @transform_2, window_bounds = array<i64: 128, 32>}, {pipeline_mode = #tpu.pipeline_mode<synchronous>, transform_indices = @transform_3, window_bounds = array<i64: 16, 128>}, {pipeline_mode = #tpu.pipeline_mode<synchronous>, transform_indices = @transform_4, window_bounds = array<i64: 288, 64>}, {pipeline_mode = #tpu.pipeline_mode<synchronous>, transform_indices = @transform_5, window_bounds = array<i64: 16, 64>}]} {
    %c0 = arith.constant 0 : index
    %c0_0 = arith.constant 0 : index
    %0 = vector.load %arg1[%c0, %c0_0] : memref<16x32xf32, #tpu.memory_space<vmem>>, vector<16x32xf32>
    %c0_1 = arith.constant 0 : index
    %c0_2 = arith.constant 0 : index
    %1 = vector.load %arg2[%c0_1, %c0_2] : memref<160x128xf32, #tpu.memory_space<vmem>>, vector<160x128xf32>
    %c0_3 = arith.constant 0 : index
    %c0_4 = arith.constant 0 : index
    %2 = vector.load %arg4[%c0_3, %c0_4] : memref<16x128xf32, #tpu.memory_space<vmem>>, vector<16x128xf32>
    %c0_5 = arith.constant 0 : index
    %c0_6 = arith.constant 0 : index
    %3 = vector.load %arg5[%c0_5, %c0_6] : memref<288x64xf32, #tpu.memory_space<vmem>>, vector<288x64xf32>
    %4 = vector.extract_strided_slice %1 {offsets = [0, 0], sizes = [32, 128], strides = [1, 1]} : vector<160x128xf32> to vector<32x128xf32>
    %5 = vector.extract_strided_slice %1 {offsets = [32, 0], sizes = [32, 32], strides = [1, 1]} : vector<160x128xf32> to vector<32x32xf32>
    %6 = vector.extract_strided_slice %1 {offsets = [64, 0], sizes = [32, 32], strides = [1, 1]} : vector<160x128xf32> to vector<32x32xf32>
    %7 = vector.extract_strided_slice %1 {offsets = [96, 0], sizes = [32, 32], strides = [1, 1]} : vector<160x128xf32> to vector<32x32xf32>
    %8 = vector.extract_strided_slice %1 {offsets = [128, 0], sizes = [32, 32], strides = [1, 1]} : vector<160x128xf32> to vector<32x32xf32>
    %9 = vector.extract_strided_slice %2 {offsets = [0, 0], sizes = [1, 128], strides = [1, 1]} : vector<16x128xf32> to vector<1x128xf32>
    %10 = vector.extract_strided_slice %2 {offsets = [1, 0], sizes = [1, 32], strides = [1, 1]} : vector<16x128xf32> to vector<1x32xf32>
    %11 = vector.extract_strided_slice %2 {offsets = [2, 0], sizes = [1, 32], strides = [1, 1]} : vector<16x128xf32> to vector<1x32xf32>
    %12 = vector.extract_strided_slice %2 {offsets = [3, 0], sizes = [1, 32], strides = [1, 1]} : vector<16x128xf32> to vector<1x32xf32>
    %13 = vector.extract_strided_slice %2 {offsets = [4, 0], sizes = [1, 32], strides = [1, 1]} : vector<16x128xf32> to vector<1x32xf32>
    %14 = vector.extract_strided_slice %2 {offsets = [5, 0], sizes = [1, 32], strides = [1, 1]} : vector<16x128xf32> to vector<1x32xf32>
    %15 = vector.extract_strided_slice %2 {offsets = [6, 0], sizes = [1, 32], strides = [1, 1]} : vector<16x128xf32> to vector<1x32xf32>
    %16 = vector.extract_strided_slice %2 {offsets = [7, 0], sizes = [1, 32], strides = [1, 1]} : vector<16x128xf32> to vector<1x32xf32>
    %17 = vector.extract_strided_slice %2 {offsets = [8, 0], sizes = [1, 32], strides = [1, 1]} : vector<16x128xf32> to vector<1x32xf32>
    %18 = vector.extract_strided_slice %2 {offsets = [9, 0], sizes = [1, 32], strides = [1, 1]} : vector<16x128xf32> to vector<1x32xf32>
    %19 = vector.extract_strided_slice %3 {offsets = [0, 0], sizes = [64, 64], strides = [1, 1]} : vector<288x64xf32> to vector<64x64xf32>
    %20 = vector.extract_strided_slice %3 {offsets = [64, 0], sizes = [64, 16], strides = [1, 1]} : vector<288x64xf32> to vector<64x16xf32>
    %21 = vector.extract_strided_slice %3 {offsets = [128, 0], sizes = [64, 32], strides = [1, 1]} : vector<288x64xf32> to vector<64x32xf32>
    %22 = vector.extract_strided_slice %3 {offsets = [192, 0], sizes = [64, 32], strides = [1, 1]} : vector<288x64xf32> to vector<64x32xf32>
    %23 = vector.extract_strided_slice %3 {offsets = [256, 0], sizes = [16, 64], strides = [1, 1]} : vector<288x64xf32> to vector<16x64xf32>
    %24 = vector.extract_strided_slice %3 {offsets = [272, 0], sizes = [16, 64], strides = [1, 1]} : vector<288x64xf32> to vector<16x64xf32>
    %cst = arith.constant dense<0.000000e+00> : vector<16x32xf32>
    %25 = tpu.matmul %0, %5, %cst {dimension_numbers = #tpu.dot_dimension_numbers<[1], [0], [0], [1], [0, 0, 1, 1], [], []>} : vector<16x32xf32>, vector<32x32xf32>, vector<16x32xf32> -> vector<16x32xf32>
    %26 = vector.broadcast %10 : vector<1x32xf32> to vector<16x32xf32>
    %27 = arith.addf %25, %26 : vector<16x32xf32>
    %cst_7 = arith.constant dense<0.000000e+00> : vector<64x32xf32>
    %28 = tpu.matmul %20, %0, %cst_7 {dimension_numbers = #tpu.dot_dimension_numbers<[1], [0], [0], [1], [0, 0, 1, 1], [], []>} : vector<64x16xf32>, vector<16x32xf32>, vector<64x32xf32> -> vector<64x32xf32>
    %cst_8 = arith.constant dense<0.000000e+00> : vector<64x32xf32>
    %29 = tpu.matmul %28, %6, %cst_8 {dimension_numbers = #tpu.dot_dimension_numbers<[1], [0], [0], [1], [0, 0, 1, 1], [], []>} : vector<64x32xf32>, vector<32x32xf32>, vector<64x32xf32> -> vector<64x32xf32>
    %30 = vector.broadcast %11 : vector<1x32xf32> to vector<64x32xf32>
    %31 = arith.addf %29, %30 : vector<64x32xf32>
    %32 = arith.mulf %31, %21 : vector<64x32xf32>
    %cst_9 = arith.constant dense<0.000000e+00> : vector<64x32xf32>
    %33 = tpu.matmul %28, %7, %cst_9 {dimension_numbers = #tpu.dot_dimension_numbers<[1], [0], [0], [1], [0, 0, 1, 1], [], []>} : vector<64x32xf32>, vector<32x32xf32>, vector<64x32xf32> -> vector<64x32xf32>
    %34 = vector.broadcast %12 : vector<1x32xf32> to vector<64x32xf32>
    %35 = arith.addf %33, %34 : vector<64x32xf32>
    %36 = arith.mulf %35, %21 : vector<64x32xf32>
    %cst_10 = arith.constant dense<0.000000e+00> : vector<16x64xf32>
    %37 = tpu.matmul %27, %32, %cst_10 {dimension_numbers = #tpu.dot_dimension_numbers<[1], [1], [0], [0], [0, 0, 1, 0], [], []>} : vector<16x32xf32>, vector<64x32xf32>, vector<16x64xf32> -> vector<16x64xf32>
    %38 = arith.addf %37, %24 : vector<16x64xf32>
    %cst_11 = arith.constant dense<0xFF800000> : vector<16xf32>
    %39 = vector.multi_reduction <maximumf>, %38, %cst_11 [1] : vector<16x64xf32> to vector<16xf32>
    %40 = vector.shape_cast %39 : vector<16xf32> to vector<16x1xf32>
    %41 = vector.broadcast %40 : vector<16x1xf32> to vector<16x64xf32>
    %42 = arith.subf %38, %41 : vector<16x64xf32>
    %43 = math.exp %42 : vector<16x64xf32>
    %cst_12 = arith.constant dense<0.000000e+00> : vector<16x64xf32>
    %44 = tpu.matmul %43, %19, %cst_12 {dimension_numbers = #tpu.dot_dimension_numbers<[1], [0], [0], [1], [0, 0, 1, 1], [], []>} : vector<16x64xf32>, vector<64x64xf32>, vector<16x64xf32> -> vector<16x64xf32>
    %45 = arith.addf %44, %23 : vector<16x64xf32>
    %46 = arith.divf %43, %45 : vector<16x64xf32>
    %cst_13 = arith.constant dense<0.000000e+00> : vector<16x32xf32>
    %47 = tpu.matmul %46, %36, %cst_13 {dimension_numbers = #tpu.dot_dimension_numbers<[1], [0], [0], [1], [0, 0, 1, 1], [], []>} : vector<16x64xf32>, vector<64x32xf32>, vector<16x32xf32> -> vector<16x32xf32>
    %cst_14 = arith.constant dense<0.000000e+00> : vector<16x32xf32>
    %48 = tpu.matmul %46, %22, %cst_14 {dimension_numbers = #tpu.dot_dimension_numbers<[1], [0], [0], [1], [0, 0, 1, 1], [], []>} : vector<16x64xf32>, vector<64x32xf32>, vector<16x32xf32> -> vector<16x32xf32>
    %c0_15 = arith.constant 0 : index
    %c32 = arith.constant 32 : index
    %49 = vector.load %arg6[%c0_15, %c32] : memref<16x64xf32, #tpu.memory_space<vmem>>, vector<16x32xf32>
    tpu.vector_store %arg6[%c0_15, %c32], %48 {strides = array<i32>} : memref<16x64xf32, #tpu.memory_space<vmem>>, vector<16x32xf32>,
    %cst_16 = arith.constant dense<0.000000e+00> : vector<16x32xf32>
    %50 = tpu.matmul %47, %8, %cst_16 {dimension_numbers = #tpu.dot_dimension_numbers<[1], [0], [0], [1], [0, 0, 1, 1], [], []>} : vector<16x32xf32>, vector<32x32xf32>, vector<16x32xf32> -> vector<16x32xf32>
    %51 = vector.broadcast %13 : vector<1x32xf32> to vector<16x32xf32>
    %52 = arith.addf %50, %51 : vector<16x32xf32>
    %53 = arith.addf %0, %52 : vector<16x32xf32>
    %cst_17 = arith.constant dense<0.000000e+00> : vector<16xf32>
    %54 = vector.multi_reduction <add>, %53, %cst_17 [1] : vector<16x32xf32> to vector<16xf32>
    %55 = vector.shape_cast %54 : vector<16xf32> to vector<16x1xf32>
    %cst_18 = arith.constant 3.200000e+01 : f32
    %56 = vector.broadcast %cst_18 : f32 to vector<16x1xf32>
    %57 = arith.divf %55, %56 : vector<16x1xf32>
    %58 = vector.broadcast %57 : vector<16x1xf32> to vector<16x32xf32>
    %59 = arith.subf %53, %58 : vector<16x32xf32>
    %60 = arith.mulf %59, %59 : vector<16x32xf32>
    %cst_19 = arith.constant dense<0.000000e+00> : vector<16xf32>
    %61 = vector.multi_reduction <add>, %60, %cst_19 [1] : vector<16x32xf32> to vector<16xf32>
    %62 = vector.shape_cast %61 : vector<16xf32> to vector<16x1xf32>
    %cst_20 = arith.constant 3.200000e+01 : f32
    %63 = vector.broadcast %cst_20 : f32 to vector<16x1xf32>
    %64 = arith.divf %62, %63 : vector<16x1xf32>
    %65 = vector.broadcast %57 : vector<16x1xf32> to vector<16x32xf32>
    %66 = arith.subf %53, %65 : vector<16x32xf32>
    %cst_21 = arith.constant 9.99999974E-6 : f32
    %67 = vector.broadcast %cst_21 : f32 to vector<16x1xf32>
    %68 = arith.addf %64, %67 : vector<16x1xf32>
    %69 = math.rsqrt %68 : vector<16x1xf32>
    %70 = vector.broadcast %69 : vector<16x1xf32> to vector<16x32xf32>
    %71 = arith.mulf %66, %70 : vector<16x32xf32>
    %72 = vector.broadcast %15 : vector<1x32xf32> to vector<16x32xf32>
    %73 = arith.mulf %71, %72 : vector<16x32xf32>
    %74 = vector.broadcast %16 : vector<1x32xf32> to vector<16x32xf32>
    %75 = arith.addf %73, %74 : vector<16x32xf32>
    %cst_22 = arith.constant dense<0.000000e+00> : vector<16x128xf32>
    %76 = tpu.matmul %75, %4, %cst_22 {dimension_numbers = #tpu.dot_dimension_numbers<[1], [0], [0], [1], [0, 0, 1, 1], [], []>} : vector<16x32xf32>, vector<32x128xf32>, vector<16x128xf32> -> vector<16x128xf32>
    %77 = vector.broadcast %9 : vector<1x128xf32> to vector<16x128xf32>
    %78 = arith.addf %76, %77 : vector<16x128xf32>
    %cst_23 = arith.constant 5.000000e-01 : f32
    %79 = vector.broadcast %cst_23 : f32 to vector<16x128xf32>
    %80 = arith.mulf %79, %78 : vector<16x128xf32>
    %cst_24 = arith.constant 0.707106769 : f32
    %81 = vector.broadcast %cst_24 : f32 to vector<16x128xf32>
    %82 = arith.mulf %78, %81 : vector<16x128xf32>
    %83 = math.erf %82 : vector<16x128xf32>
    %cst_25 = arith.constant 1.000000e+00 : f32
    %84 = vector.broadcast %cst_25 : f32 to vector<16x128xf32>
    %85 = arith.addf %84, %83 : vector<16x128xf32>
    %86 = arith.mulf %80, %85 : vector<16x128xf32>
    %c0_26 = arith.constant 0 : index
    %c0_27 = arith.constant 0 : index
    %87 = vector.load %arg3[%c0_26, %c0_27] : memref<128x32xf32, #tpu.memory_space<vmem>>, vector<128x32xf32>
    %cst_28 = arith.constant dense<0.000000e+00> : vector<16x32xf32>
    %88 = tpu.matmul %86, %87, %cst_28 {dimension_numbers = #tpu.dot_dimension_numbers<[1], [0], [0], [1], [0, 0, 1, 1], [], []>} : vector<16x128xf32>, vector<128x32xf32>, vector<16x32xf32> -> vector<16x32xf32>
    %89 = vector.broadcast %14 : vector<1x32xf32> to vector<16x32xf32>
    %90 = arith.addf %88, %89 : vector<16x32xf32>
    %91 = arith.addf %75, %90 : vector<16x32xf32>
    %cst_29 = arith.constant dense<0.000000e+00> : vector<16xf32>
    %92 = vector.multi_reduction <add>, %91, %cst_29 [1] : vector<16x32xf32> to vector<16xf32>
    %93 = vector.shape_cast %92 : vector<16xf32> to vector<16x1xf32>
    %cst_30 = arith.constant 3.200000e+01 : f32
    %94 = vector.broadcast %cst_30 : f32 to vector<16x1xf32>
    %95 = arith.divf %93, %94 : vector<16x1xf32>
    %96 = vector.broadcast %95 : vector<16x1xf32> to vector<16x32xf32>
    %97 = arith.subf %91, %96 : vector<16x32xf32>
    %98 = arith.mulf %97, %97 : vector<16x32xf32>
    %cst_31 = arith.constant dense<0.000000e+00> : vector<16xf32>
    %99 = vector.multi_reduction <add>, %98, %cst_31 [1] : vector<16x32xf32> to vector<16xf32>
    %100 = vector.shape_cast %99 : vector<16xf32> to vector<16x1xf32>
    %cst_32 = arith.constant 3.200000e+01 : f32
    %101 = vector.broadcast %cst_32 : f32 to vector<16x1xf32>
    %102 = arith.divf %100, %101 : vector<16x1xf32>
    %103 = vector.broadcast %95 : vector<16x1xf32> to vector<16x32xf32>
    %104 = arith.subf %91, %103 : vector<16x32xf32>
    %cst_33 = arith.constant 9.99999974E-6 : f32
    %105 = vector.broadcast %cst_33 : f32 to vector<16x1xf32>
    %106 = arith.addf %102, %105 : vector<16x1xf32>
    %107 = math.rsqrt %106 : vector<16x1xf32>
    %108 = vector.broadcast %107 : vector<16x1xf32> to vector<16x32xf32>
    %109 = arith.mulf %104, %108 : vector<16x32xf32>
    %110 = vector.broadcast %17 : vector<1x32xf32> to vector<16x32xf32>
    %111 = arith.mulf %109, %110 : vector<16x32xf32>
    %112 = vector.broadcast %18 : vector<1x32xf32> to vector<16x32xf32>
    %113 = arith.addf %111, %112 : vector<16x32xf32>
    %114 = arith.addf %75, %113 : vector<16x32xf32>
    %c0_34 = arith.constant 0 : index
    %c0_35 = arith.constant 0 : index
    %115 = vector.load %arg6[%c0_34, %c0_35] : memref<16x64xf32, #tpu.memory_space<vmem>>, vector<16x32xf32>
    tpu.vector_store %arg6[%c0_34, %c0_35], %114 {strides = array<i32>} : memref<16x64xf32, #tpu.memory_space<vmem>>, vector<16x32xf32>,
    return
  }
  func.func @transform_0(%arg0: i32) -> (i32, i32) {
    %c0_i32 = arith.constant 0 : i32
    %c0_i32_0 = arith.constant 0 : i32
    %c0_i32_1 = arith.constant 0 : i32
    return %c0_i32, %c0_i32_0 : i32, i32
  }
  func.func @transform_1(%arg0: i32) -> (i32, i32) {
    %c0_i32 = arith.constant 0 : i32
    %c0_i32_0 = arith.constant 0 : i32
    %c0_i32_1 = arith.constant 0 : i32
    return %c0_i32, %c0_i32_0 : i32, i32
  }
  func.func @transform_2(%arg0: i32) -> (i32, i32) {
    %c0_i32 = arith.constant 0 : i32
    %c0_i32_0 = arith.constant 0 : i32
    %c0_i32_1 = arith.constant 0 : i32
    return %c0_i32, %c0_i32_0 : i32, i32
  }
  func.func @transform_3(%arg0: i32) -> (i32, i32) {
    %c0_i32 = arith.constant 0 : i32
    %c0_i32_0 = arith.constant 0 : i32
    %c0_i32_1 = arith.constant 0 : i32
    return %c0_i32, %c0_i32_0 : i32, i32
  }
  func.func @transform_4(%arg0: i32) -> (i32, i32) {
    %c0_i32 = arith.constant 0 : i32
    %c0_i32_0 = arith.constant 0 : i32
    %c0_i32_1 = arith.constant 0 : i32
    return %c0_i32, %c0_i32_0 : i32, i32
  }
  func.func @transform_5(%arg0: i32) -> (i32, i32) {
    %c0_i32 = arith.constant 0 : i32
    %c0_i32_0 = arith.constant 0 : i32
    %c0_i32_1 = arith.constant 0 : i32
    return %c0_i32, %c0_i32_0 : i32, i32
  }
}

</mosaic_0001>

<llo_original>
// kernel: tpu_custom_call.1
$region0: #{tpu_custom_call.1}
  #allocation0 [shape = 'u32[]', space=smem, size = 0x4, offset = 0x4, fixed_abs, tag = 'smem constant byte address 0x4 - core index']
  #allocation1 [shape = 'u32[144,128]{1,0:T(1,128)}', space=vmem, size = 0x12000, scoped, tag = 'internal scratch']
  %s0 = inlined_call_operand.vmem [shape: f32[16,32], index: 0, kind: input, shape index: {}]
  %s1 = inlined_call_operand.vmem [shape: f32[160,128], index: 1, kind: input, shape index: {}]
  %s2 = inlined_call_operand.vmem [shape: f32[128,32], index: 2, kind: input, shape index: {}]
  %s3 = inlined_call_operand.vmem [shape: f32[16,128], index: 3, kind: input, shape index: {}]
  %s4 = inlined_call_operand.vmem [shape: f32[288,64], index: 4, kind: input, shape index: {}]
  %s5 = inlined_call_operand.hbm [shape: f32[16,64], index: 5, kind: output, shape index: {}]
  %s6 = sld [smem:[#allocation0]]
  $region30: #{tpu_custom_call.1} parent=0
    _
  %s8 = ssub.s32 1, %s6
  %s9 = scalar_select 0, %s8, %s6
  $region1: #{tpu_custom_call.1} parent=0
    #allocation2 [shape = 'u8[8192]{0}', space=vmem, size = 0x2000, scoped, tag = 'output window, operand 0, single buffered']
    #allocation3 [shape = 's32[1]{0}', space=sflag, size = 0x4, scoped, tag = 'scoped memory for tpu_custom_call.1']
    %10 = vsyncpa [#allocation3], 0
    // Predicated region
    $region2: #{tpu_custom_call.1} parent=1 // pred_check
      _
    $region3: #{tpu_custom_call.1} parent=1 // pred_check_branch
      %12 = sbr.rel (0) target = $region5
    $region4: #{tpu_custom_call.1} parent=1 // pred_region
      _
    $region5: #{tpu_custom_call.1} parent=1 // pred_fallthru
      _
    // Predicated region
    $region6: #{tpu_custom_call.1} parent=1 // pred_check
      _
    $region7: #{tpu_custom_call.1} parent=1 // pred_check_branch
      %14 = sbr.rel (0) target = $region9
    $region8: #{tpu_custom_call.1} parent=1 // pred_region
      _
    $region9: #{tpu_custom_call.1} parent=1 // pred_fallthru
      _
    // Predicated region
    $region10: #{tpu_custom_call.1} parent=1 // pred_check
      _
    $region11: #{tpu_custom_call.1} parent=1 // pred_check_branch
      %16 = sbr.rel (0) target = $region13
    $region12: #{tpu_custom_call.1} parent=1 // pred_region
      _
    $region13: #{tpu_custom_call.1} parent=1 // pred_fallthru
      _
    // Predicated region
    $region14: #{tpu_custom_call.1} parent=1 // pred_check
      _
    $region15: #{tpu_custom_call.1} parent=1 // pred_check_branch
      %18 = sbr.rel (0) target = $region17
    $region16: #{tpu_custom_call.1} parent=1 // pred_region
      _
    $region17: #{tpu_custom_call.1} parent=1 // pred_fallthru
      _
    // Predicated region
    $region18: #{tpu_custom_call.1} parent=1 // pred_check
      _
    $region19: #{tpu_custom_call.1} parent=1 // pred_check_branch
      %20 = sbr.rel (0) target = $region21
    $region20: #{tpu_custom_call.1} parent=1 // pred_region
      _
    $region21: #{tpu_custom_call.1} parent=1 // pred_fallthru
      _
    %v21 = vld [vmem:[%s0] sm:$0xff]
    %v22 = vld [vmem:[%s0 + $0x8] sm:$0xff]
    %v23 = vld [vmem:[%s1] sm:$0xff]
    %v24 = vld [vmem:[%s1 + $0x8] sm:$0xff]
    %v25 = vld [vmem:[%s1 + $0x10] sm:$0xff]
    %v26 = vld [vmem:[%s1 + $0x18] sm:$0xff]
    %v27 = vld [vmem:[%s1 + $0x20] sm:$0xff]
    %v28 = vld [vmem:[%s1 + $0x28] sm:$0xff]
    %v29 = vld [vmem:[%s1 + $0x30] sm:$0xff]
    %v30 = vld [vmem:[%s1 + $0x38] sm:$0xff]
    %v31 = vld [vmem:[%s1 + $0x40] sm:$0xff]
    %v32 = vld [vmem:[%s1 + $0x48] sm:$0xff]
    %v33 = vld [vmem:[%s1 + $0x50] sm:$0xff]
    %v34 = vld [vmem:[%s1 + $0x58] sm:$0xff]
    %v35 = vld [vmem:[%s1 + $0x60] sm:$0xff]
    %v36 = vld [vmem:[%s1 + $0x68] sm:$0xff]
    %v37 = vld [vmem:[%s1 + $0x70] sm:$0xff]
    %v38 = vld [vmem:[%s1 + $0x78] sm:$0xff]
    %v39 = vld [vmem:[%s1 + $0x80] sm:$0xff]
    %v40 = vld [vmem:[%s1 + $0x88] sm:$0xff]
    %v41 = vld [vmem:[%s1 + $0x90] sm:$0xff]
    %v42 = vld [vmem:[%s1 + $0x98] sm:$0xff]
    %v43 = vld [vmem:[%s3] sm:$0xff]
    %v44 = vld [vmem:[%s3 + $0x8] sm:$0xff]
    %v45 = vld [vmem:[%s4] sm:$0xff]
    %v46 = vld [vmem:[%s4 + $0x8] sm:$0xff]
    %v47 = vld [vmem:[%s4 + $0x10] sm:$0xff]
    %v48 = vld [vmem:[%s4 + $0x18] sm:$0xff]
    %v49 = vld [vmem:[%s4 + $0x20] sm:$0xff]
    %v50 = vld [vmem:[%s4 + $0x28] sm:$0xff]
    %v51 = vld [vmem:[%s4 + $0x30] sm:$0xff]
    %v52 = vld [vmem:[%s4 + $0x38] sm:$0xff]
    %v53 = vld [vmem:[%s4 + $0x40] sm:$0xff]
    %v54 = vld [vmem:[%s4 + $0x48] sm:$0xff]
    %v55 = vld [vmem:[%s4 + $0x50] sm:$0xff]
    %v56 = vld [vmem:[%s4 + $0x58] sm:$0xff]
    %v57 = vld [vmem:[%s4 + $0x60] sm:$0xff]
    %v58 = vld [vmem:[%s4 + $0x68] sm:$0xff]
    %v59 = vld [vmem:[%s4 + $0x70] sm:$0xff]
    %v60 = vld [vmem:[%s4 + $0x78] sm:$0xff]
    %v61 = vld [vmem:[%s4 + $0x80] sm:$0xff]
    %v62 = vld [vmem:[%s4 + $0x88] sm:$0xff]
    %v63 = vld [vmem:[%s4 + $0x90] sm:$0xff]
    %v64 = vld [vmem:[%s4 + $0x98] sm:$0xff]
    %v65 = vld [vmem:[%s4 + $0xa0] sm:$0xff]
    %v66 = vld [vmem:[%s4 + $0xa8] sm:$0xff]
    %v67 = vld [vmem:[%s4 + $0xb0] sm:$0xff]
    %v68 = vld [vmem:[%s4 + $0xb8] sm:$0xff]
    %v69 = vld [vmem:[%s4 + $0xc0] sm:$0xff]
    %v70 = vld [vmem:[%s4 + $0xc8] sm:$0xff]
    %v71 = vld [vmem:[%s4 + $0xd0] sm:$0xff]
    %v72 = vld [vmem:[%s4 + $0xd8] sm:$0xff]
    %v73 = vld [vmem:[%s4 + $0xe0] sm:$0xff]
    %v74 = vld [vmem:[%s4 + $0xe8] sm:$0xff]
    %v75 = vld [vmem:[%s4 + $0xf0] sm:$0xff]
    %v76 = vld [vmem:[%s4 + $0xf8] sm:$0xff]
    %v77 = vld [vmem:[%s4 + $0x100] sm:$0xff]
    %v78 = vld [vmem:[%s4 + $0x108] sm:$0xff]
    %v79 = vld [vmem:[%s4 + $0x110] sm:$0xff]
    %v80 = vld [vmem:[%s4 + $0x118] sm:$0xff]
    %v81 = vlaneseq
    %v82 = vshrl.u32 %v81, 7
    %v83 = vsub.s32 1, %v82
    %v84 = vrot.slane %v43, %v83
    %vm85 = vcmask 261120
    %v87 = vsel %vm85, %v21, 0
    %v90 = vsel %vm85, %v22, 0
    %92 = vmatprep.subr.mxu0 0.0
    %93 = vmatpush1.msra.mxu0 0.0
    %94 = vmatprep.subr.mxu0 0.0
    %95 = vmatpush1.msra.mxu0 0.0
    %96 = vmatprep.subr.mxu0 0.0
    %97 = vmatpush1.msra.mxu0 0.0
    %98 = vmatprep.subr.mxu0 0.0
    %99 = vmatpush1.msra.mxu0 0.0
    %100 = vmatprep.subr.mxu0 0.0
    %101 = vmatpush1.msra.mxu0 0.0
    %102 = vmatprep.subr.mxu0 0.0
    %103 = vmatpush1.msra.mxu0 0.0
    %104 = vmatprep.subr.mxu0 0.0
    %105 = vmatpush1.msra.mxu0 0.0
    %106 = vmatprep.subr.mxu0 0.0
    %107 = vmatpush1.msra.mxu0 0.0
    %108 = vmatprep.subr.mxu0 0.0
    %109 = vmatpush1.msra.mxu0 0.0
    %110 = vmatprep.subr.mxu0 0.0
    %111 = vmatpush1.msra.mxu0 0.0
    %112 = vmatprep.subr.mxu0 0.0
    %113 = vmatpush1.msra.mxu0 0.0
    %114 = vmatprep.subr.mxu0 0.0
    %115 = vmatpush1.msra.mxu0 0.0
    %116 = vmatprep.subr.mxu0 0.0
    %117 = vmatpush1.msra.mxu0 %v30
    %118 = vmatprep.subr.mxu0 0.0
    %119 = vmatpush1.msra.mxu0 %v29
    %120 = vmatprep.subr.mxu0 0.0
    %121 = vmatpush1.msra.mxu0 %v28
    %122 = vmatprep.subr.mxu0 0.0
    %123 = vmatpush1.msra.mxu0 %v27
    %124 = vmatprep.subr.mxu0 0.0
    %125 = vmatpush2.msra.mxu0 0.0
    %126 = vmatprep.subr.mxu0 0.0
    %127 = vmatpush2.msra.mxu0 0.0
    %128 = vmatprep.subr.mxu0 0.0
    %129 = vmatpush2.msra.mxu0 0.0
    %130 = vmatprep.subr.mxu0 0.0
    %131 = vmatpush2.msra.mxu0 0.0
    %132 = vmatprep.subr.mxu0 0.0
    %133 = vmatpush2.msra.mxu0 0.0
    %134 = vmatprep.subr.mxu0 0.0
    %135 = vmatpush2.msra.mxu0 0.0
    %136 = vmatprep.subr.mxu0 0.0
    %137 = vmatpush2.msra.mxu0 0.0
    %138 = vmatprep.subr.mxu0 0.0
    %139 = vmatpush2.msra.mxu0 0.0
    %140 = vmatprep.subr.mxu0 0.0
    %141 = vmatpush2.msra.mxu0 0.0
    %142 = vmatprep.subr.mxu0 0.0
    %143 = vmatpush2.msra.mxu0 0.0
    %144 = vmatprep.subr.mxu0 0.0
    %145 = vmatpush2.msra.mxu0 0.0
    %146 = vmatprep.subr.mxu0 0.0
    %147 = vmatpush2.msra.mxu0 0.0
    %148 = vmatprep.subr.mxu0 0.0
    %149 = vmatpush2.msra.mxu0 0.0
    %150 = vmatprep.subr.mxu0 0.0
    %151 = vmatpush2.msra.mxu0 0.0
    %152 = vmatprep.subr.mxu0 0.0
    %153 = vmatpush2.msra.mxu0 0.0
    %154 = vmatprep.subr.mxu0 0.0
    %155 = vmatpush2.msra.mxu0 0.0
    %156 = vmatprep.mubr.f32.mxu0 0.0
    %157 = vmatmul.mubr.f32.gmra.mxu0 %v87
    %v158 = vpop.f32.mrf.mxu0
    %v159 = vadd.f32 %v84, %v158
    %v160 = vpop.f32.mrf.mxu0
    %161 = vmatprep.mubr.f32.mxu0 0.0
    %162 = vmatmul.mubr.f32.gmra.mxu0 %v90
    %v163 = vpop.f32.mrf.mxu0
    %v164 = vadd.f32 %v84, %v163
    %v165 = vpop.f32.mrf.mxu0
    %166 = vdwg.mxu0
    %vm167 = vcmask 130048
    %v169 = vsel %vm167, %v53, 0
    %v172 = vsel %vm167, %v54, 0
    %v175 = vsel %vm167, %v55, 0
    %v178 = vsel %vm167, %v56, 0
    %v181 = vsel %vm167, %v57, 0
    %v184 = vsel %vm167, %v58, 0
    %v187 = vsel %vm167, %v59, 0
    %v190 = vsel %vm167, %v60, 0
    %192 = vmatprep.subr.mxu0 0.0
    %193 = vmatpush1.msra.mxu0 0.0
    %194 = vmatprep.subr.mxu0 0.0
    %195 = vmatpush1.msra.mxu0 0.0
    %196 = vmatprep.subr.mxu0 0.0
    %197 = vmatpush1.msra.mxu0 0.0
    %198 = vmatprep.subr.mxu0 0.0
    %199 = vmatpush1.msra.mxu0 0.0
    %200 = vmatprep.subr.mxu0 0.0
    %201 = vmatpush1.msra.mxu0 0.0
    %202 = vmatprep.subr.mxu0 0.0
    %203 = vmatpush1.msra.mxu0 0.0
    %204 = vmatprep.subr.mxu0 0.0
    %205 = vmatpush1.msra.mxu0 0.0
    %206 = vmatprep.subr.mxu0 0.0
    %207 = vmatpush1.msra.mxu0 0.0
    %208 = vmatprep.subr.mxu0 0.0
    %209 = vmatpush1.msra.mxu0 0.0
    %210 = vmatprep.subr.mxu0 0.0
    %211 = vmatpush1.msra.mxu0 0.0
    %212 = vmatprep.subr.mxu0 0.0
    %213 = vmatpush1.msra.mxu0 0.0
    %214 = vmatprep.subr.mxu0 0.0
    %215 = vmatpush1.msra.mxu0 0.0
    %216 = vmatprep.subr.mxu0 0.0
    %217 = vmatpush1.msra.mxu0 0.0
    %218 = vmatprep.subr.mxu0 0.0
    %219 = vmatpush1.msra.mxu0 0.0
    %220 = vmatprep.subr.mxu0 0.0
    %221 = vmatpush1.msra.mxu0 %v22
    %222 = vmatprep.subr.mxu0 0.0
    %223 = vmatpush1.msra.mxu0 %v21
    %224 = vmatprep.subr.mxu0 0.0
    %225 = vmatpush2.msra.mxu0 0.0
    %226 = vmatprep.subr.mxu0 0.0
    %227 = vmatpush2.msra.mxu0 0.0
    %228 = vmatprep.subr.mxu0 0.0
    %229 = vmatpush2.msra.mxu0 0.0
    %230 = vmatprep.subr.mxu0 0.0
    %231 = vmatpush2.msra.mxu0 0.0
    %232 = vmatprep.subr.mxu0 0.0
    %233 = vmatpush2.msra.mxu0 0.0
    %234 = vmatprep.subr.mxu0 0.0
    %235 = vmatpush2.msra.mxu0 0.0
    %236 = vmatprep.subr.mxu0 0.0
    %237 = vmatpush2.msra.mxu0 0.0
    %238 = vmatprep.subr.mxu0 0.0
    %239 = vmatpush2.msra.mxu0 0.0
    %240 = vmatprep.subr.mxu0 0.0
    %241 = vmatpush2.msra.mxu0 0.0
    %242 = vmatprep.subr.mxu0 0.0
    %243 = vmatpush2.msra.mxu0 0.0
    %244 = vmatprep.subr.mxu0 0.0
    %245 = vmatpush2.msra.mxu0 0.0
    %246 = vmatprep.subr.mxu0 0.0
    %247 = vmatpush2.msra.mxu0 0.0
    %248 = vmatprep.subr.mxu0 0.0
    %249 = vmatpush2.msra.mxu0 0.0
    %250 = vmatprep.subr.mxu0 0.0
    %251 = vmatpush2.msra.mxu0 0.0
    %252 = vmatprep.subr.mxu0 0.0
    %253 = vmatpush2.msra.mxu0 0.0
    %254 = vmatprep.subr.mxu0 0.0
    %255 = vmatpush2.msra.mxu0 0.0
    %256 = vmatprep.mubr.f32.mxu0 0.0
    %257 = vmatmul.mubr.f32.gmra.mxu0 %v169
    %v258 = vpop.f32.mrf.mxu0
    %v259 = vadd.f32 0.0, %v258
    %v260 = vpop.f32.mrf.mxu0
    %261 = vmatprep.mubr.f32.mxu0 0.0
    %262 = vmatmul.mubr.f32.gmra.mxu0 %v172
    %v263 = vpop.f32.mrf.mxu0
    %v264 = vadd.f32 0.0, %v263
    %v265 = vpop.f32.mrf.mxu0
    %266 = vmatprep.mubr.f32.mxu0 0.0
    %267 = vmatmul.mubr.f32.gmra.mxu0 %v175
    %v268 = vpop.f32.mrf.mxu0
    %v269 = vadd.f32 0.0, %v268
    %v270 = vpop.f32.mrf.mxu0
    %271 = vmatprep.mubr.f32.mxu0 0.0
    %272 = vmatmul.mubr.f32.gmra.mxu0 %v178
    %v273 = vpop.f32.mrf.mxu0
    %v274 = vadd.f32 0.0, %v273
    %v275 = vpop.f32.mrf.mxu0
    %276 = vmatprep.mubr.f32.mxu0 0.0
    %277 = vmatmul.mubr.f32.gmra.mxu0 %v181
    %v278 = vpop.f32.mrf.mxu0
    %v279 = vadd.f32 0.0, %v278
    %v280 = vpop.f32.mrf.mxu0
    %281 = vmatprep.mubr.f32.mxu0 0.0
    %282 = vmatmul.mubr.f32.gmra.mxu0 %v184
    %v283 = vpop.f32.mrf.mxu0
    %v284 = vadd.f32 0.0, %v283
    %v285 = vpop.f32.mrf.mxu0
    %286 = vmatprep.mubr.f32.mxu0 0.0
    %287 = vmatmul.mubr.f32.gmra.mxu0 %v187
    %v288 = vpop.f32.mrf.mxu0
    %v289 = vadd.f32 0.0, %v288
    %v290 = vpop.f32.mrf.mxu0
    %291 = vmatprep.mubr.f32.mxu0 0.0
    %292 = vmatmul.mubr.f32.gmra.mxu0 %v190
    %v293 = vpop.f32.mrf.mxu0
    %v294 = vadd.f32 0.0, %v293
    %v295 = vpop.f32.mrf.mxu0
    %296 = vdwg.mxu0
    %v297 = vlaneseq
    %v298 = vshrl.u32 %v297, 7
    %v299 = vsub.s32 2, %v298
    %v300 = vrot.slane %v43, %v299
    %v302 = vsel %vm85, %v259, 0
    %v305 = vsel %vm85, %v264, 0
    %v308 = vsel %vm85, %v269, 0
    %v311 = vsel %vm85, %v274, 0
    %v314 = vsel %vm85, %v279, 0
    %v317 = vsel %vm85, %v284, 0
    %v320 = vsel %vm85, %v289, 0
    %v323 = vsel %vm85, %v294, 0
    %325 = vmatprep.subr.mxu0 0.0
    %326 = vmatpush1.msra.mxu0 0.0
    %327 = vmatprep.subr.mxu0 0.0
    %328 = vmatpush1.msra.mxu0 0.0
    %329 = vmatprep.subr.mxu0 0.0
    %330 = vmatpush1.msra.mxu0 0.0
    %331 = vmatprep.subr.mxu0 0.0
    %332 = vmatpush1.msra.mxu0 0.0
    %333 = vmatprep.subr.mxu0 0.0
    %334 = vmatpush1.msra.mxu0 0.0
    %335 = vmatprep.subr.mxu0 0.0
    %336 = vmatpush1.msra.mxu0 0.0
    %337 = vmatprep.subr.mxu0 0.0
    %338 = vmatpush1.msra.mxu0 0.0
    %339 = vmatprep.subr.mxu0 0.0
    %340 = vmatpush1.msra.mxu0 0.0
    %341 = vmatprep.subr.mxu0 0.0
    %342 = vmatpush1.msra.mxu0 0.0
    %343 = vmatprep.subr.mxu0 0.0
    %344 = vmatpush1.msra.mxu0 0.0
    %345 = vmatprep.subr.mxu0 0.0
    %346 = vmatpush1.msra.mxu0 0.0
    %347 = vmatprep.subr.mxu0 0.0
    %348 = vmatpush1.msra.mxu0 0.0
    %349 = vmatprep.subr.mxu0 0.0
    %350 = vmatpush1.msra.mxu0 %v34
    %351 = vmatprep.subr.mxu0 0.0
    %352 = vmatpush1.msra.mxu0 %v33
    %353 = vmatprep.subr.mxu0 0.0
    %354 = vmatpush1.msra.mxu0 %v32
    %355 = vmatprep.subr.mxu0 0.0
    %356 = vmatpush1.msra.mxu0 %v31
    %357 = vmatprep.subr.mxu0 0.0
    %358 = vmatpush2.msra.mxu0 0.0
    %359 = vmatprep.subr.mxu0 0.0
    %360 = vmatpush2.msra.mxu0 0.0
    %361 = vmatprep.subr.mxu0 0.0
    %362 = vmatpush2.msra.mxu0 0.0
    %363 = vmatprep.subr.mxu0 0.0
    %364 = vmatpush2.msra.mxu0 0.0
    %365 = vmatprep.subr.mxu0 0.0
    %366 = vmatpush2.msra.mxu0 0.0
    %367 = vmatprep.subr.mxu0 0.0
    %368 = vmatpush2.msra.mxu0 0.0
    %369 = vmatprep.subr.mxu0 0.0
    %370 = vmatpush2.msra.mxu0 0.0
    %371 = vmatprep.subr.mxu0 0.0
    %372 = vmatpush2.msra.mxu0 0.0
    %373 = vmatprep.subr.mxu0 0.0
    %374 = vmatpush2.msra.mxu0 0.0
    %375 = vmatprep.subr.mxu0 0.0
    %376 = vmatpush2.msra.mxu0 0.0
    %377 = vmatprep.subr.mxu0 0.0
    %378 = vmatpush2.msra.mxu0 0.0
    %379 = vmatprep.subr.mxu0 0.0
    %380 = vmatpush2.msra.mxu0 0.0
    %381 = vmatprep.subr.mxu0 0.0
    %382 = vmatpush2.msra.mxu0 0.0
    %383 = vmatprep.subr.mxu0 0.0
    %384 = vmatpush2.msra.mxu0 0.0
    %385 = vmatprep.subr.mxu0 0.0
    %386 = vmatpush2.msra.mxu0 0.0
    %387 = vmatprep.subr.mxu0 0.0
    %388 = vmatpush2.msra.mxu0 0.0
    %389 = vmatprep.mubr.f32.mxu0 0.0
    %390 = vmatmul.mubr.f32.gmra.mxu0 %v302
    %v391 = vpop.f32.mrf.mxu0
    %v392 = vadd.f32 %v300, %v391
    %v393 = vpop.f32.mrf.mxu0
    %394 = vmatprep.mubr.f32.mxu0 0.0
    %395 = vmatmul.mubr.f32.gmra.mxu0 %v305
    %v396 = vpop.f32.mrf.mxu0
    %v397 = vadd.f32 %v300, %v396
    %v398 = vpop.f32.mrf.mxu0
    %399 = vmatprep.mubr.f32.mxu0 0.0
    %400 = vmatmul.mubr.f32.gmra.mxu0 %v308
    %v401 = vpop.f32.mrf.mxu0
    %v402 = vadd.f32 %v300, %v401
    %v403 = vpop.f32.mrf.mxu0
    %404 = vmatprep.mubr.f32.mxu0 0.0
    %405 = vmatmul.mubr.f32.gmra.mxu0 %v311
    %v406 = vpop.f32.mrf.mxu0
    %v407 = vadd.f32 %v300, %v406
    %v408 = vpop.f32.mrf.mxu0
    %409 = vmatprep.mubr.f32.mxu0 0.0
    %410 = vmatmul.mubr.f32.gmra.mxu0 %v314
    %v411 = vpop.f32.mrf.mxu0
    %v412 = vadd.f32 %v300, %v411
    %v413 = vpop.f32.mrf.mxu0
    %414 = vmatprep.mubr.f32.mxu0 0.0
    %415 = vmatmul.mubr.f32.gmra.mxu0 %v317
    %v416 = vpop.f32.mrf.mxu0
    %v417 = vadd.f32 %v300, %v416
    %v418 = vpop.f32.mrf.mxu0
    %419 = vmatprep.mubr.f32.mxu0 0.0
    %420 = vmatmul.mubr.f32.gmra.mxu0 %v320
    %v421 = vpop.f32.mrf.mxu0
    %v422 = vadd.f32 %v300, %v421
    %v423 = vpop.f32.mrf.mxu0
    %424 = vmatprep.mubr.f32.mxu0 0.0
    %425 = vmatmul.mubr.f32.gmra.mxu0 %v323
    %v426 = vpop.f32.mrf.mxu0
    %v427 = vadd.f32 %v300, %v426
    %v428 = vpop.f32.mrf.mxu0
    %429 = vdwg.mxu0
    %v430 = vmul.f32 %v392, %v61
    %v431 = vmul.f32 %v397, %v62
    %v432 = vmul.f32 %v402, %v63
    %v433 = vmul.f32 %v407, %v64
    %v434 = vmul.f32 %v412, %v65
    %v435 = vmul.f32 %v417, %v66
    %v436 = vmul.f32 %v422, %v67
    %v437 = vmul.f32 %v427, %v68
    %v438 = vlaneseq
    %v439 = vshrl.u32 %v438, 7
    %v440 = vsub.s32 3, %v439
    %v441 = vrot.slane %v43, %v440
    %442 = vmatprep.subr.mxu0 0.0
    %443 = vmatpush1.msra.mxu0 0.0
    %444 = vmatprep.subr.mxu0 0.0
    %445 = vmatpush1.msra.mxu0 0.0
    %446 = vmatprep.subr.mxu0 0.0
    %447 = vmatpush1.msra.mxu0 0.0
    %448 = vmatprep.subr.mxu0 0.0
    %449 = vmatpush1.msra.mxu0 0.0
    %450 = vmatprep.subr.mxu0 0.0
    %451 = vmatpush1.msra.mxu0 0.0
    %452 = vmatprep.subr.mxu0 0.0
    %453 = vmatpush1.msra.mxu0 0.0
    %454 = vmatprep.subr.mxu0 0.0
    %455 = vmatpush1.msra.mxu0 0.0
    %456 = vmatprep.subr.mxu0 0.0
    %457 = vmatpush1.msra.mxu0 0.0
    %458 = vmatprep.subr.mxu0 0.0
    %459 = vmatpush1.msra.mxu0 0.0
    %460 = vmatprep.subr.mxu0 0.0
    %461 = vmatpush1.msra.mxu0 0.0
    %462 = vmatprep.subr.mxu0 0.0
    %463 = vmatpush1.msra.mxu0 0.0
    %464 = vmatprep.subr.mxu0 0.0
    %465 = vmatpush1.msra.mxu0 0.0
    %466 = vmatprep.subr.mxu0 0.0
    %467 = vmatpush1.msra.mxu0 %v38
    %468 = vmatprep.subr.mxu0 0.0
    %469 = vmatpush1.msra.mxu0 %v37
    %470 = vmatprep.subr.mxu0 0.0
    %471 = vmatpush1.msra.mxu0 %v36
    %472 = vmatprep.subr.mxu0 0.0
    %473 = vmatpush1.msra.mxu0 %v35
    %474 = vmatprep.subr.mxu0 0.0
    %475 = vmatpush2.msra.mxu0 0.0
    %476 = vmatprep.subr.mxu0 0.0
    %477 = vmatpush2.msra.mxu0 0.0
    %478 = vmatprep.subr.mxu0 0.0
    %479 = vmatpush2.msra.mxu0 0.0
    %480 = vmatprep.subr.mxu0 0.0
    %481 = vmatpush2.msra.mxu0 0.0
    %482 = vmatprep.subr.mxu0 0.0
    %483 = vmatpush2.msra.mxu0 0.0
    %484 = vmatprep.subr.mxu0 0.0
    %485 = vmatpush2.msra.mxu0 0.0
    %486 = vmatprep.subr.mxu0 0.0
    %487 = vmatpush2.msra.mxu0 0.0
    %488 = vmatprep.subr.mxu0 0.0
    %489 = vmatpush2.msra.mxu0 0.0
    %490 = vmatprep.subr.mxu0 0.0
    %491 = vmatpush2.msra.mxu0 0.0
    %492 = vmatprep.subr.mxu0 0.0
    %493 = vmatpush2.msra.mxu0 0.0
    %494 = vmatprep.subr.mxu0 0.0
    %495 = vmatpush2.msra.mxu0 0.0
    %496 = vmatprep.subr.mxu0 0.0
    %497 = vmatpush2.msra.mxu0 0.0
    %498 = vmatprep.subr.mxu0 0.0
    %499 = vmatpush2.msra.mxu0 0.0
    %500 = vmatprep.subr.mxu0 0.0
    %501 = vmatpush2.msra.mxu0 0.0
    %502 = vmatprep.subr.mxu0 0.0
    %503 = vmatpush2.msra.mxu0 0.0
    %504 = vmatprep.subr.mxu0 0.0
    %505 = vmatpush2.msra.mxu0 0.0
    %506 = vmatprep.mubr.f32.mxu0 0.0
    %507 = vmatmul.mubr.f32.gmra.mxu0 %v302
    %v508 = vpop.f32.mrf.mxu0
    %v509 = vadd.f32 %v441, %v508
    %v510 = vpop.f32.mrf.mxu0
    %511 = vmatprep.mubr.f32.mxu0 0.0
    %512 = vmatmul.mubr.f32.gmra.mxu0 %v305
    %v513 = vpop.f32.mrf.mxu0
    %v514 = vadd.f32 %v441, %v513
    %v515 = vpop.f32.mrf.mxu0
    %516 = vmatprep.mubr.f32.mxu0 0.0
    %517 = vmatmul.mubr.f32.gmra.mxu0 %v308
    %v518 = vpop.f32.mrf.mxu0
    %v519 = vadd.f32 %v441, %v518
    %v520 = vpop.f32.mrf.mxu0
    %521 = vmatprep.mubr.f32.mxu0 0.0
    %522 = vmatmul.mubr.f32.gmra.mxu0 %v311
    %v523 = vpop.f32.mrf.mxu0
    %v524 = vadd.f32 %v441, %v523
    %v525 = vpop.f32.mrf.mxu0
    %526 = vmatprep.mubr.f32.mxu0 0.0
    %527 = vmatmul.mubr.f32.gmra.mxu0 %v314
    %v528 = vpop.f32.mrf.mxu0
    %v529 = vadd.f32 %v441, %v528
    %v530 = vpop.f32.mrf.mxu0
    %531 = vmatprep.mubr.f32.mxu0 0.0
    %532 = vmatmul.mubr.f32.gmra.mxu0 %v317
    %v533 = vpop.f32.mrf.mxu0
    %v534 = vadd.f32 %v441, %v533
    %v535 = vpop.f32.mrf.mxu0
    %536 = vmatprep.mubr.f32.mxu0 0.0
    %537 = vmatmul.mubr.f32.gmra.mxu0 %v320
    %v538 = vpop.f32.mrf.mxu0
    %v539 = vadd.f32 %v441, %v538
    %v540 = vpop.f32.mrf.mxu0
    %541 = vmatprep.mubr.f32.mxu0 0.0
    %542 = vmatmul.mubr.f32.gmra.mxu0 %v323
    %v543 = vpop.f32.mrf.mxu0
    %v544 = vadd.f32 %v441, %v543
    %v545 = vpop.f32.mrf.mxu0
    %546 = vdwg.mxu0
    %v547 = vmul.f32 %v509, %v61
    %v548 = vmul.f32 %v514, %v62
    %v549 = vmul.f32 %v519, %v63
    %v550 = vmul.f32 %v524, %v64
    %v551 = vmul.f32 %v529, %v65
    %v552 = vmul.f32 %v534, %v66
    %v553 = vmul.f32 %v539, %v67
    %v554 = vmul.f32 %v544, %v68
    %v556 = vsel %vm85, %v159, 0
    %v559 = vsel %vm85, %v164, 0
    %v562 = vsel %vm85, %v430, 0
    %v565 = vsel %vm85, %v431, 0
    %v568 = vsel %vm85, %v432, 0
    %v571 = vsel %vm85, %v433, 0
    %v574 = vsel %vm85, %v434, 0
    %v577 = vsel %vm85, %v435, 0
    %v580 = vsel %vm85, %v436, 0
    %v583 = vsel %vm85, %v437, 0
    %585 = vmatprep.subr.mxu0 0.0
    %586 = vmatpush1.xpose.msra.mxu0 0.0
    %587 = vmatprep.subr.mxu0 0.0
    %588 = vmatpush1.xpose.msra.mxu0 0.0
    %589 = vmatprep.subr.mxu0 0.0
    %590 = vmatpush1.xpose.msra.mxu0 0.0
    %591 = vmatprep.subr.mxu0 0.0
    %592 = vmatpush1.xpose.msra.mxu0 0.0
    %593 = vmatprep.subr.mxu0 0.0
    %594 = vmatpush1.xpose.msra.mxu0 0.0
    %595 = vmatprep.subr.mxu0 0.0
    %596 = vmatpush1.xpose.msra.mxu0 0.0
    %597 = vmatprep.subr.mxu0 0.0
    %598 = vmatpush1.xpose.msra.mxu0 0.0
    %599 = vmatprep.subr.mxu0 0.0
    %600 = vmatpush1.xpose.msra.mxu0 0.0
    %601 = vmatprep.subr.mxu0 0.0
    %602 = vmatpush1.xpose.msra.mxu0 %v583
    %603 = vmatprep.subr.mxu0 0.0
    %604 = vmatpush1.xpose.msra.mxu0 %v580
    %605 = vmatprep.subr.mxu0 0.0
    %606 = vmatpush1.xpose.msra.mxu0 %v577
    %607 = vmatprep.subr.mxu0 0.0
    %608 = vmatpush1.xpose.msra.mxu0 %v574
    %609 = vmatprep.subr.mxu0 0.0
    %610 = vmatpush1.xpose.msra.mxu0 %v571
    %611 = vmatprep.subr.mxu0 0.0
    %612 = vmatpush1.xpose.msra.mxu0 %v568
    %613 = vmatprep.subr.mxu0 0.0
    %614 = vmatpush1.xpose.msra.mxu0 %v565
    %615 = vmatprep.subr.mxu0 0.0
    %616 = vmatpush1.xpose.msra.mxu0 %v562
    %617 = vmatprep.subr.mxu0 0.0
    %618 = vmatpush2.xpose.msra.mxu0 0.0
    %619 = vmatprep.subr.mxu0 0.0
    %620 = vmatpush2.xpose.msra.mxu0 0.0
    %621 = vmatprep.subr.mxu0 0.0
    %622 = vmatpush2.xpose.msra.mxu0 0.0
    %623 = vmatprep.subr.mxu0 0.0
    %624 = vmatpush2.xpose.msra.mxu0 0.0
    %625 = vmatprep.subr.mxu0 0.0
    %626 = vmatpush2.xpose.msra.mxu0 0.0
    %627 = vmatprep.subr.mxu0 0.0
    %628 = vmatpush2.xpose.msra.mxu0 0.0
    %629 = vmatprep.subr.mxu0 0.0
    %630 = vmatpush2.xpose.msra.mxu0 0.0
    %631 = vmatprep.subr.mxu0 0.0
    %632 = vmatpush2.xpose.msra.mxu0 0.0
    %633 = vmatprep.subr.mxu0 0.0
    %634 = vmatpush2.xpose.msra.mxu0 0.0
    %635 = vmatprep.subr.mxu0 0.0
    %636 = vmatpush2.xpose.msra.mxu0 0.0
    %637 = vmatprep.subr.mxu0 0.0
    %638 = vmatpush2.xpose.msra.mxu0 0.0
    %639 = vmatprep.subr.mxu0 0.0
    %640 = vmatpush2.xpose.msra.mxu0 0.0
    %641 = vmatprep.subr.mxu0 0.0
    %642 = vmatpush2.xpose.msra.mxu0 0.0
    %643 = vmatprep.subr.mxu0 0.0
    %644 = vmatpush2.xpose.msra.mxu0 0.0
    %645 = vmatprep.subr.mxu0 0.0
    %646 = vmatpush2.xpose.msra.mxu0 0.0
    %647 = vmatprep.subr.mxu0 0.0
    %648 = vmatpush2.xpose.msra.mxu0 0.0
    %649 = vmatprep.mubr.f32.mxu0 0.0
    %650 = vmatmul.mubr.f32.gmra.mxu0 %v556
    %v651 = vpop.f32.mrf.mxu0
    %v652 = vadd.f32 %v79, %v651
    %v653 = vpop.f32.mrf.mxu0
    %654 = vmatprep.mubr.f32.mxu0 0.0
    %655 = vmatmul.mubr.f32.gmra.mxu0 %v559
    %v656 = vpop.f32.mrf.mxu0
    %v657 = vadd.f32 %v80, %v656
    %v658 = vpop.f32.mrf.mxu0
    %659 = vdwg.mxu0
    %vm660 = vcmask 523264
    %v661 = vsel %vm660, %v652, -inf
    %662 = vmax.xlane.f32.xlu0 %v661
    %v663 = vpop.xlane.xlu0 %662
    %v664 = vsel %vm660, %v657, -inf
    %665 = vmax.xlane.f32.xlu0 %v664
    %v666 = vpop.xlane.xlu0 %665
    %v667 = vsub.f32 %v652, %v663
    %v668 = vsub.f32 %v657, %v666
    %v669 = vmul.f32 %v667, 1.442695
    %v670 = vpow.pop %v669
    %v671 = vmul.f32 %v668, 1.442695
    %v672 = vpow.pop %v671
    %v674 = vsel %vm660, %v670, 0
    %v677 = vsel %vm660, %v672, 0
    %679 = vmatprep.subr.mxu0 0.0
    %680 = vmatpush1.msra.mxu0 0.0
    %681 = vmatprep.subr.mxu0 0.0
    %682 = vmatpush1.msra.mxu0 0.0
    %683 = vmatprep.subr.mxu0 0.0
    %684 = vmatpush1.msra.mxu0 0.0
    %685 = vmatprep.subr.mxu0 0.0
    %686 = vmatpush1.msra.mxu0 0.0
    %687 = vmatprep.subr.mxu0 0.0
    %688 = vmatpush1.msra.mxu0 0.0
    %689 = vmatprep.subr.mxu0 0.0
    %690 = vmatpush1.msra.mxu0 0.0
    %691 = vmatprep.subr.mxu0 0.0
    %692 = vmatpush1.msra.mxu0 0.0
    %693 = vmatprep.subr.mxu0 0.0
    %694 = vmatpush1.msra.mxu0 0.0
    %695 = vmatprep.subr.mxu0 0.0
    %696 = vmatpush1.msra.mxu0 %v52
    %697 = vmatprep.subr.mxu0 0.0
    %698 = vmatpush1.msra.mxu0 %v51
    %699 = vmatprep.subr.mxu0 0.0
    %700 = vmatpush1.msra.mxu0 %v50
    %701 = vmatprep.subr.mxu0 0.0
    %702 = vmatpush1.msra.mxu0 %v49
    %703 = vmatprep.subr.mxu0 0.0
    %704 = vmatpush1.msra.mxu0 %v48
    %705 = vmatprep.subr.mxu0 0.0
    %706 = vmatpush1.msra.mxu0 %v47
    %707 = vmatprep.subr.mxu0 0.0
    %708 = vmatpush1.msra.mxu0 %v46
    %709 = vmatprep.subr.mxu0 0.0
    %710 = vmatpush1.msra.mxu0 %v45
    %711 = vmatprep.subr.mxu0 0.0
    %712 = vmatpush2.msra.mxu0 0.0
    %713 = vmatprep.subr.mxu0 0.0
    %714 = vmatpush2.msra.mxu0 0.0
    %715 = vmatprep.subr.mxu0 0.0
    %716 = vmatpush2.msra.mxu0 0.0
    %717 = vmatprep.subr.mxu0 0.0
    %718 = vmatpush2.msra.mxu0 0.0
    %719 = vmatprep.subr.mxu0 0.0
    %720 = vmatpush2.msra.mxu0 0.0
    %721 = vmatprep.subr.mxu0 0.0
    %722 = vmatpush2.msra.mxu0 0.0
    %723 = vmatprep.subr.mxu0 0.0
    %724 = vmatpush2.msra.mxu0 0.0
    %725 = vmatprep.subr.mxu0 0.0
    %726 = vmatpush2.msra.mxu0 0.0
    %727 = vmatprep.subr.mxu0 0.0
    %728 = vmatpush2.msra.mxu0 0.0
    %729 = vmatprep.subr.mxu0 0.0
    %730 = vmatpush2.msra.mxu0 0.0
    %731 = vmatprep.subr.mxu0 0.0
    %732 = vmatpush2.msra.mxu0 0.0
    %733 = vmatprep.subr.mxu0 0.0
    %734 = vmatpush2.msra.mxu0 0.0
    %735 = vmatprep.subr.mxu0 0.0
    %736 = vmatpush2.msra.mxu0 0.0
    %737 = vmatprep.subr.mxu0 0.0
    %738 = vmatpush2.msra.mxu0 0.0
    %739 = vmatprep.subr.mxu0 0.0
    %740 = vmatpush2.msra.mxu0 0.0
    %741 = vmatprep.subr.mxu0 0.0
    %742 = vmatpush2.msra.mxu0 0.0
    %743 = vmatprep.mubr.f32.mxu0 0.0
    %744 = vmatmul.mubr.f32.gmra.mxu0 %v674
    %v745 = vpop.f32.mrf.mxu0
    %v746 = vadd.f32 %v77, %v745
    %v747 = vpop.f32.mrf.mxu0
    %748 = vmatprep.mubr.f32.mxu0 0.0
    %749 = vmatmul.mubr.f32.gmra.mxu0 %v677
    %v750 = vpop.f32.mrf.mxu0
    %v751 = vadd.f32 %v78, %v750
    %v752 = vpop.f32.mrf.mxu0
    %753 = vdwg.mxu0
    %v754 = vrcp.pop %v746
    %v755 = vmul.f32 %v670, %v754
    %v756 = vrcp.pop %v751
    %v757 = vmul.f32 %v672, %v756
    %v759 = vsel %vm660, %v755, 0
    %v762 = vsel %vm660, %v757, 0
    %764 = vmatprep.subr.mxu0 0.0
    %765 = vmatpush1.msra.mxu0 0.0
    %766 = vmatprep.subr.mxu0 0.0
    %767 = vmatpush1.msra.mxu0 0.0
    %768 = vmatprep.subr.mxu0 0.0
    %769 = vmatpush1.msra.mxu0 0.0
    %770 = vmatprep.subr.mxu0 0.0
    %771 = vmatpush1.msra.mxu0 0.0
    %772 = vmatprep.subr.mxu0 0.0
    %773 = vmatpush1.msra.mxu0 0.0
    %774 = vmatprep.subr.mxu0 0.0
    %775 = vmatpush1.msra.mxu0 0.0
    %776 = vmatprep.subr.mxu0 0.0
    %777 = vmatpush1.msra.mxu0 0.0
    %778 = vmatprep.subr.mxu0 0.0
    %779 = vmatpush1.msra.mxu0 0.0
    %780 = vmatprep.subr.mxu0 0.0
    %781 = vmatpush1.msra.mxu0 %v554
    %782 = vmatprep.subr.mxu0 0.0
    %783 = vmatpush1.msra.mxu0 %v553
    %784 = vmatprep.subr.mxu0 0.0
    %785 = vmatpush1.msra.mxu0 %v552
    %786 = vmatprep.subr.mxu0 0.0
    %787 = vmatpush1.msra.mxu0 %v551
    %788 = vmatprep.subr.mxu0 0.0
    %789 = vmatpush1.msra.mxu0 %v550
    %790 = vmatprep.subr.mxu0 0.0
    %791 = vmatpush1.msra.mxu0 %v549
    %792 = vmatprep.subr.mxu0 0.0
    %793 = vmatpush1.msra.mxu0 %v548
    %794 = vmatprep.subr.mxu0 0.0
    %795 = vmatpush1.msra.mxu0 %v547
    %796 = vmatprep.subr.mxu0 0.0
    %797 = vmatpush2.msra.mxu0 0.0
    %798 = vmatprep.subr.mxu0 0.0
    %799 = vmatpush2.msra.mxu0 0.0
    %800 = vmatprep.subr.mxu0 0.0
    %801 = vmatpush2.msra.mxu0 0.0
    %802 = vmatprep.subr.mxu0 0.0
    %803 = vmatpush2.msra.mxu0 0.0
    %804 = vmatprep.subr.mxu0 0.0
    %805 = vmatpush2.msra.mxu0 0.0
    %806 = vmatprep.subr.mxu0 0.0
    %807 = vmatpush2.msra.mxu0 0.0
    %808 = vmatprep.subr.mxu0 0.0
    %809 = vmatpush2.msra.mxu0 0.0
    %810 = vmatprep.subr.mxu0 0.0
    %811 = vmatpush2.msra.mxu0 0.0
    %812 = vmatprep.subr.mxu0 0.0
    %813 = vmatpush2.msra.mxu0 0.0
    %814 = vmatprep.subr.mxu0 0.0
    %815 = vmatpush2.msra.mxu0 0.0
    %816 = vmatprep.subr.mxu0 0.0
    %817 = vmatpush2.msra.mxu0 0.0
    %818 = vmatprep.subr.mxu0 0.0
    %819 = vmatpush2.msra.mxu0 0.0
    %820 = vmatprep.subr.mxu0 0.0
    %821 = vmatpush2.msra.mxu0 0.0
    %822 = vmatprep.subr.mxu0 0.0
    %823 = vmatpush2.msra.mxu0 0.0
    %824 = vmatprep.subr.mxu0 0.0
    %825 = vmatpush2.msra.mxu0 0.0
    %826 = vmatprep.subr.mxu0 0.0
    %827 = vmatpush2.msra.mxu0 0.0
    %828 = vmatprep.mubr.f32.mxu0 0.0
    %829 = vmatmul.mubr.f32.gmra.mxu0 %v759
    %v830 = vpop.f32.mrf.mxu0
    %v831 = vadd.f32 0.0, %v830
    %v832 = vpop.f32.mrf.mxu0
    %833 = vmatprep.mubr.f32.mxu0 0.0
    %834 = vmatmul.mubr.f32.gmra.mxu0 %v762
    %v835 = vpop.f32.mrf.mxu0
    %v836 = vadd.f32 0.0, %v835
    %v837 = vpop.f32.mrf.mxu0
    %838 = vdwg.mxu0
    %839 = vmatprep.subr.mxu0 0.0
    %840 = vmatpush1.msra.mxu0 0.0
    %841 = vmatprep.subr.mxu0 0.0
    %842 = vmatpush1.msra.mxu0 0.0
    %843 = vmatprep.subr.mxu0 0.0
    %844 = vmatpush1.msra.mxu0 0.0
    %845 = vmatprep.subr.mxu0 0.0
    %846 = vmatpush1.msra.mxu0 0.0
    %847 = vmatprep.subr.mxu0 0.0
    %848 = vmatpush1.msra.mxu0 0.0
    %849 = vmatprep.subr.mxu0 0.0
    %850 = vmatpush1.msra.mxu0 0.0
    %851 = vmatprep.subr.mxu0 0.0
    %852 = vmatpush1.msra.mxu0 0.0
    %853 = vmatprep.subr.mxu0 0.0
    %854 = vmatpush1.msra.mxu0 0.0
    %855 = vmatprep.subr.mxu0 0.0
    %856 = vmatpush1.msra.mxu0 %v76
    %857 = vmatprep.subr.mxu0 0.0
    %858 = vmatpush1.msra.mxu0 %v75
    %859 = vmatprep.subr.mxu0 0.0
    %860 = vmatpush1.msra.mxu0 %v74
    %861 = vmatprep.subr.mxu0 0.0
    %862 = vmatpush1.msra.mxu0 %v73
    %863 = vmatprep.subr.mxu0 0.0
    %864 = vmatpush1.msra.mxu0 %v72
    %865 = vmatprep.subr.mxu0 0.0
    %866 = vmatpush1.msra.mxu0 %v71
    %867 = vmatprep.subr.mxu0 0.0
    %868 = vmatpush1.msra.mxu0 %v70
    %869 = vmatprep.subr.mxu0 0.0
    %870 = vmatpush1.msra.mxu0 %v69
    %871 = vmatprep.subr.mxu0 0.0
    %872 = vmatpush2.msra.mxu0 0.0
    %873 = vmatprep.subr.mxu0 0.0
    %874 = vmatpush2.msra.mxu0 0.0
    %875 = vmatprep.subr.mxu0 0.0
    %876 = vmatpush2.msra.mxu0 0.0
    %877 = vmatprep.subr.mxu0 0.0
    %878 = vmatpush2.msra.mxu0 0.0
    %879 = vmatprep.subr.mxu0 0.0
    %880 = vmatpush2.msra.mxu0 0.0
    %881 = vmatprep.subr.mxu0 0.0
    %882 = vmatpush2.msra.mxu0 0.0
    %883 = vmatprep.subr.mxu0 0.0
    %884 = vmatpush2.msra.mxu0 0.0
    %885 = vmatprep.subr.mxu0 0.0
    %886 = vmatpush2.msra.mxu0 0.0
    %887 = vmatprep.subr.mxu0 0.0
    %888 = vmatpush2.msra.mxu0 0.0
    %889 = vmatprep.subr.mxu0 0.0
    %890 = vmatpush2.msra.mxu0 0.0
    %891 = vmatprep.subr.mxu0 0.0
    %892 = vmatpush2.msra.mxu0 0.0
    %893 = vmatprep.subr.mxu0 0.0
    %894 = vmatpush2.msra.mxu0 0.0
    %895 = vmatprep.subr.mxu0 0.0
    %896 = vmatpush2.msra.mxu0 0.0
    %897 = vmatprep.subr.mxu0 0.0
    %898 = vmatpush2.msra.mxu0 0.0
    %899 = vmatprep.subr.mxu0 0.0
    %900 = vmatpush2.msra.mxu0 0.0
    %901 = vmatprep.subr.mxu0 0.0
    %902 = vmatpush2.msra.mxu0 0.0
    %903 = vmatprep.mubr.f32.mxu0 0.0
    %904 = vmatmul.mubr.f32.gmra.mxu0 %v759
    %v905 = vpop.f32.mrf.mxu0
    %v906 = vadd.f32 0.0, %v905
    %v907 = vpop.f32.mrf.mxu0
    %908 = vmatprep.mubr.f32.mxu0 0.0
    %909 = vmatmul.mubr.f32.gmra.mxu0 %v762
    %v910 = vpop.f32.mrf.mxu0
    %v911 = vadd.f32 0.0, %v910
    %v912 = vpop.f32.mrf.mxu0
    %913 = vdwg.mxu0
    %916 = vrot.lane.b32.xlu0 %v906, 32
    %v917 = vpop.permute.xlu0 %916
    %918 = vrot.lane.b32.xlu0 %v911, 32
    %v919 = vpop.permute.xlu0 %918
    %vm922 = vcmask 523520
    %923 = vst.msk [vmem:[#allocation2] sm:$0xff] %vm922, %v917
    %924 = vst.msk [vmem:[#allocation2 + $0x8] sm:$0xff] %vm922, %v919
    %v925 = vlaneseq
    %v926 = vshrl.u32 %v925, 7
    %v927 = vsub.s32 4, %v926
    %v928 = vrot.slane %v43, %v927
    %v930 = vsel %vm85, %v831, 0
    %v933 = vsel %vm85, %v836, 0
    %935 = vmatprep.subr.mxu0 0.0
    %936 = vmatpush1.msra.mxu0 0.0
    %937 = vmatprep.subr.mxu0 0.0
    %938 = vmatpush1.msra.mxu0 0.0
    %939 = vmatprep.subr.mxu0 0.0
    %940 = vmatpush1.msra.mxu0 0.0
    %941 = vmatprep.subr.mxu0 0.0
    %942 = vmatpush1.msra.mxu0 0.0
    %943 = vmatprep.subr.mxu0 0.0
    %944 = vmatpush1.msra.mxu0 0.0
    %945 = vmatprep.subr.mxu0 0.0
    %946 = vmatpush1.msra.mxu0 0.0
    %947 = vmatprep.subr.mxu0 0.0
    %948 = vmatpush1.msra.mxu0 0.0
    %949 = vmatprep.subr.mxu0 0.0
    %950 = vmatpush1.msra.mxu0 0.0
    %951 = vmatprep.subr.mxu0 0.0
    %952 = vmatpush1.msra.mxu0 0.0
    %953 = vmatprep.subr.mxu0 0.0
    %954 = vmatpush1.msra.mxu0 0.0
    %955 = vmatprep.subr.mxu0 0.0
    %956 = vmatpush1.msra.mxu0 0.0
    %957 = vmatprep.subr.mxu0 0.0
    %958 = vmatpush1.msra.mxu0 0.0
    %959 = vmatprep.subr.mxu0 0.0
    %960 = vmatpush1.msra.mxu0 %v42
    %961 = vmatprep.subr.mxu0 0.0
    %962 = vmatpush1.msra.mxu0 %v41
    %963 = vmatprep.subr.mxu0 0.0
    %964 = vmatpush1.msra.mxu0 %v40
    %965 = vmatprep.subr.mxu0 0.0
    %966 = vmatpush1.msra.mxu0 %v39
    %967 = vmatprep.subr.mxu0 0.0
    %968 = vmatpush2.msra.mxu0 0.0
    %969 = vmatprep.subr.mxu0 0.0
    %970 = vmatpush2.msra.mxu0 0.0
    %971 = vmatprep.subr.mxu0 0.0
    %972 = vmatpush2.msra.mxu0 0.0
    %973 = vmatprep.subr.mxu0 0.0
    %974 = vmatpush2.msra.mxu0 0.0
    %975 = vmatprep.subr.mxu0 0.0
    %976 = vmatpush2.msra.mxu0 0.0
    %977 = vmatprep.subr.mxu0 0.0
    %978 = vmatpush2.msra.mxu0 0.0
    %979 = vmatprep.subr.mxu0 0.0
    %980 = vmatpush2.msra.mxu0 0.0
    %981 = vmatprep.subr.mxu0 0.0
    %982 = vmatpush2.msra.mxu0 0.0
    %983 = vmatprep.subr.mxu0 0.0
    %984 = vmatpush2.msra.mxu0 0.0
    %985 = vmatprep.subr.mxu0 0.0
    %986 = vmatpush2.msra.mxu0 0.0
    %987 = vmatprep.subr.mxu0 0.0
    %988 = vmatpush2.msra.mxu0 0.0
    %989 = vmatprep.subr.mxu0 0.0
    %990 = vmatpush2.msra.mxu0 0.0
    %991 = vmatprep.subr.mxu0 0.0
    %992 = vmatpush2.msra.mxu0 0.0
    %993 = vmatprep.subr.mxu0 0.0
    %994 = vmatpush2.msra.mxu0 0.0
    %995 = vmatprep.subr.mxu0 0.0
    %996 = vmatpush2.msra.mxu0 0.0
    %997 = vmatprep.subr.mxu0 0.0
    %998 = vmatpush2.msra.mxu0 0.0
    %999 = vmatprep.mubr.f32.mxu0 0.0
    %1000 = vmatmul.mubr.f32.gmra.mxu0 %v930
    %v1001 = vpop.f32.mrf.mxu0
    %v1002 = vadd.f32 %v928, %v1001
    %v1003 = vpop.f32.mrf.mxu0
    %1004 = vmatprep.mubr.f32.mxu0 0.0
    %1005 = vmatmul.mubr.f32.gmra.mxu0 %v933
    %v1006 = vpop.f32.mrf.mxu0
    %v1007 = vadd.f32 %v928, %v1006
    %v1008 = vpop.f32.mrf.mxu0
    %1009 = vdwg.mxu0
    %v1010 = vadd.f32 %v21, %v1002
    %v1011 = vadd.f32 %v22, %v1007
    %v1012 = vsel %vm85, %v1010, 0.0
    %1013 = vadd.xlane.f32.xlu0 %v1012
    %v1014 = vpop.xlane.xlu0 %1013
    %v1015 = vsel %vm85, %v1011, 0.0
    %1016 = vadd.xlane.f32.xlu0 %v1015
    %v1017 = vpop.xlane.xlu0 %1016
    %v1018 = vrcp.pop 32.0
    %v1019 = vmul.f32 %v1014, %v1018
    %v1020 = vmul.f32 %v1017, %v1018
    %v1021 = vsub.f32 %v1010, %v1019
    %v1022 = vsub.f32 %v1011, %v1020
    %v1023 = vmul.f32 %v1021, %v1021
    %v1024 = vmul.f32 %v1022, %v1022
    %v1025 = vsel %vm85, %v1023, 0.0
    %1026 = vadd.xlane.f32.xlu0 %v1025
    %v1027 = vpop.xlane.xlu0 %1026
    %v1028 = vsel %vm85, %v1024, 0.0
    %1029 = vadd.xlane.f32.xlu0 %v1028
    %v1030 = vpop.xlane.xlu0 %1029
    %v1031 = vmul.f32 %v1027, %v1018
    %v1032 = vmul.f32 %v1030, %v1018
    %v1033 = vadd.f32 %v1031, 1e-05
    %v1034 = vadd.f32 %v1032, 1e-05
    %v1035 = vrsqrt.pop %v1033
    %v1036 = vrsqrt.pop %v1034
    %v1037 = vmul.f32 %v1021, %v1035
    %v1038 = vmul.f32 %v1022, %v1036
    %v1039 = vlaneseq
    %v1040 = vshrl.u32 %v1039, 7
    %v1041 = vsub.s32 6, %v1040
    %v1042 = vrot.slane %v43, %v1041
    %v1043 = vmul.f32 %v1037, %v1042
    %v1044 = vmul.f32 %v1038, %v1042
    %v1045 = vlaneseq
    %v1046 = vshrl.u32 %v1045, 7
    %v1047 = vsub.s32 7, %v1046
    %v1048 = vrot.slane %v43, %v1047
    %v1049 = vadd.f32 %v1043, %v1048
    %v1050 = vadd.f32 %v1044, %v1048
    %v1051 = vlaneseq
    %v1052 = vshrl.u32 %v1051, 7
    %v1053 = vsub.s32 0, %v1052
    %v1054 = vrot.slane %v43, %v1053
    %v1056 = vsel %vm85, %v1049, 0
    %v1059 = vsel %vm85, %v1050, 0
    %1061 = vmatprep.subr.mxu0 0.0
    %1062 = vmatpush1.msra.mxu0 0.0
    %1063 = vmatprep.subr.mxu0 0.0
    %1064 = vmatpush1.msra.mxu0 0.0
    %1065 = vmatprep.subr.mxu0 0.0
    %1066 = vmatpush1.msra.mxu0 0.0
    %1067 = vmatprep.subr.mxu0 0.0
    %1068 = vmatpush1.msra.mxu0 0.0
    %1069 = vmatprep.subr.mxu0 0.0
    %1070 = vmatpush1.msra.mxu0 0.0
    %1071 = vmatprep.subr.mxu0 0.0
    %1072 = vmatpush1.msra.mxu0 0.0
    %1073 = vmatprep.subr.mxu0 0.0
    %1074 = vmatpush1.msra.mxu0 0.0
    %1075 = vmatprep.subr.mxu0 0.0
    %1076 = vmatpush1.msra.mxu0 0.0
    %1077 = vmatprep.subr.mxu0 0.0
    %1078 = vmatpush1.msra.mxu0 0.0
    %1079 = vmatprep.subr.mxu0 0.0
    %1080 = vmatpush1.msra.mxu0 0.0
    %1081 = vmatprep.subr.mxu0 0.0
    %1082 = vmatpush1.msra.mxu0 0.0
    %1083 = vmatprep.subr.mxu0 0.0
    %1084 = vmatpush1.msra.mxu0 0.0
    %1085 = vmatprep.subr.mxu0 0.0
    %1086 = vmatpush1.msra.mxu0 %v26
    %1087 = vmatprep.subr.mxu0 0.0
    %1088 = vmatpush1.msra.mxu0 %v25
    %1089 = vmatprep.subr.mxu0 0.0
    %1090 = vmatpush1.msra.mxu0 %v24
    %1091 = vmatprep.subr.mxu0 0.0
    %1092 = vmatpush1.msra.mxu0 %v23
    %1093 = vmatprep.subr.mxu0 0.0
    %1094 = vmatpush2.msra.mxu0 0.0
    %1095 = vmatprep.subr.mxu0 0.0
    %1096 = vmatpush2.msra.mxu0 0.0
    %1097 = vmatprep.subr.mxu0 0.0
    %1098 = vmatpush2.msra.mxu0 0.0
    %1099 = vmatprep.subr.mxu0 0.0
    %1100 = vmatpush2.msra.mxu0 0.0
    %1101 = vmatprep.subr.mxu0 0.0
    %1102 = vmatpush2.msra.mxu0 0.0
    %1103 = vmatprep.subr.mxu0 0.0
    %1104 = vmatpush2.msra.mxu0 0.0
    %1105 = vmatprep.subr.mxu0 0.0
    %1106 = vmatpush2.msra.mxu0 0.0
    %1107 = vmatprep.subr.mxu0 0.0
    %1108 = vmatpush2.msra.mxu0 0.0
    %1109 = vmatprep.subr.mxu0 0.0
    %1110 = vmatpush2.msra.mxu0 0.0
    %1111 = vmatprep.subr.mxu0 0.0
    %1112 = vmatpush2.msra.mxu0 0.0
    %1113 = vmatprep.subr.mxu0 0.0
    %1114 = vmatpush2.msra.mxu0 0.0
    %1115 = vmatprep.subr.mxu0 0.0
    %1116 = vmatpush2.msra.mxu0 0.0
    %1117 = vmatprep.subr.mxu0 0.0
    %1118 = vmatpush2.msra.mxu0 0.0
    %1119 = vmatprep.subr.mxu0 0.0
    %1120 = vmatpush2.msra.mxu0 0.0
    %1121 = vmatprep.subr.mxu0 0.0
    %1122 = vmatpush2.msra.mxu0 0.0
    %1123 = vmatprep.subr.mxu0 0.0
    %1124 = vmatpush2.msra.mxu0 0.0
    %1125 = vmatprep.mubr.f32.mxu0 0.0
    %1126 = vmatmul.mubr.f32.gmra.mxu0 %v1056
    %v1127 = vpop.f32.mrf.mxu0
    %v1128 = vadd.f32 %v1054, %v1127
    %v1129 = vpop.f32.mrf.mxu0
    %1130 = vmatprep.mubr.f32.mxu0 0.0
    %1131 = vmatmul.mubr.f32.gmra.mxu0 %v1059
    %v1132 = vpop.f32.mrf.mxu0
    %v1133 = vadd.f32 %v1054, %v1132
    %v1134 = vpop.f32.mrf.mxu0
    %1135 = vdwg.mxu0
    %v1136 = vmul.f32 %v1128, 0.5
    %v1137 = vmul.f32 %v1133, 0.5
    %v1138 = vmul.f32 %v1128, 0.70710677
    %v1139 = vmul.f32 %v1133, 0.70710677
    %v1140 = verf.f32.pop %v1138
    %v1141 = verf.f32.pop %v1139
    %v1142 = vadd.f32 %v1140, 1.0
    %v1143 = vadd.f32 %v1141, 1.0
    %v1144 = vmul.f32 %v1136, %v1142
    %v1145 = vmul.f32 %v1137, %v1143
    %v1146 = vld [vmem:[%s2] sm:$0xff]
    %v1147 = vld [vmem:[%s2 + $0x8] sm:$0xff]
    %v1148 = vld [vmem:[%s2 + $0x10] sm:$0xff]
    %v1149 = vld [vmem:[%s2 + $0x18] sm:$0xff]
    %v1150 = vld [vmem:[%s2 + $0x20] sm:$0xff]
    %v1151 = vld [vmem:[%s2 + $0x28] sm:$0xff]
    %v1152 = vld [vmem:[%s2 + $0x30] sm:$0xff]
    %v1153 = vld [vmem:[%s2 + $0x38] sm:$0xff]
    %v1154 = vld [vmem:[%s2 + $0x40] sm:$0xff]
    %v1155 = vld [vmem:[%s2 + $0x48] sm:$0xff]
    %v1156 = vld [vmem:[%s2 + $0x50] sm:$0xff]
    %v1157 = vld [vmem:[%s2 + $0x58] sm:$0xff]
    %v1158 = vld [vmem:[%s2 + $0x60] sm:$0xff]
    %v1159 = vld [vmem:[%s2 + $0x68] sm:$0xff]
    %v1160 = vld [vmem:[%s2 + $0x70] sm:$0xff]
    %v1161 = vld [vmem:[%s2 + $0x78] sm:$0xff]
    %v1162 = vlaneseq
    %v1163 = vshrl.u32 %v1162, 7
    %v1164 = vsub.s32 5, %v1163
    %v1165 = vrot.slane %v43, %v1164
    %1166 = vmatprep.subr.mxu0 0.0
    %1167 = vmatpush1.msra.mxu0 %v1161
    %1168 = vmatprep.subr.mxu0 0.0
    %1169 = vmatpush1.msra.mxu0 %v1160
    %1170 = vmatprep.subr.mxu0 0.0
    %1171 = vmatpush1.msra.mxu0 %v1159
    %1172 = vmatprep.subr.mxu0 0.0
    %1173 = vmatpush1.msra.mxu0 %v1158
    %1174 = vmatprep.subr.mxu0 0.0
    %1175 = vmatpush1.msra.mxu0 %v1157
    %1176 = vmatprep.subr.mxu0 0.0
    %1177 = vmatpush1.msra.mxu0 %v1156
    %1178 = vmatprep.subr.mxu0 0.0
    %1179 = vmatpush1.msra.mxu0 %v1155
    %1180 = vmatprep.subr.mxu0 0.0
    %1181 = vmatpush1.msra.mxu0 %v1154
    %1182 = vmatprep.subr.mxu0 0.0
    %1183 = vmatpush1.msra.mxu0 %v1153
    %1184 = vmatprep.subr.mxu0 0.0
    %1185 = vmatpush1.msra.mxu0 %v1152
    %1186 = vmatprep.subr.mxu0 0.0
    %1187 = vmatpush1.msra.mxu0 %v1151
    %1188 = vmatprep.subr.mxu0 0.0
    %1189 = vmatpush1.msra.mxu0 %v1150
    %1190 = vmatprep.subr.mxu0 0.0
    %1191 = vmatpush1.msra.mxu0 %v1149
    %1192 = vmatprep.subr.mxu0 0.0
    %1193 = vmatpush1.msra.mxu0 %v1148
    %1194 = vmatprep.subr.mxu0 0.0
    %1195 = vmatpush1.msra.mxu0 %v1147
    %1196 = vmatprep.subr.mxu0 0.0
    %1197 = vmatpush1.msra.mxu0 %v1146
    %1198 = vmatprep.subr.mxu0 0.0
    %1199 = vmatpush2.msra.mxu0 0.0
    %1200 = vmatprep.subr.mxu0 0.0
    %1201 = vmatpush2.msra.mxu0 0.0
    %1202 = vmatprep.subr.mxu0 0.0
    %1203 = vmatpush2.msra.mxu0 0.0
    %1204 = vmatprep.subr.mxu0 0.0
    %1205 = vmatpush2.msra.mxu0 0.0
    %1206 = vmatprep.subr.mxu0 0.0
    %1207 = vmatpush2.msra.mxu0 0.0
    %1208 = vmatprep.subr.mxu0 0.0
    %1209 = vmatpush2.msra.mxu0 0.0
    %1210 = vmatprep.subr.mxu0 0.0
    %1211 = vmatpush2.msra.mxu0 0.0
    %1212 = vmatprep.subr.mxu0 0.0
    %1213 = vmatpush2.msra.mxu0 0.0
    %1214 = vmatprep.subr.mxu0 0.0
    %1215 = vmatpush2.msra.mxu0 0.0
    %1216 = vmatprep.subr.mxu0 0.0
    %1217 = vmatpush2.msra.mxu0 0.0
    %1218 = vmatprep.subr.mxu0 0.0
    %1219 = vmatpush2.msra.mxu0 0.0
    %1220 = vmatprep.subr.mxu0 0.0
    %1221 = vmatpush2.msra.mxu0 0.0
    %1222 = vmatprep.subr.mxu0 0.0
    %1223 = vmatpush2.msra.mxu0 0.0
    %1224 = vmatprep.subr.mxu0 0.0
    %1225 = vmatpush2.msra.mxu0 0.0
    %1226 = vmatprep.subr.mxu0 0.0
    %1227 = vmatpush2.msra.mxu0 0.0
    %1228 = vmatprep.subr.mxu0 0.0
    %1229 = vmatpush2.msra.mxu0 0.0
    %1230 = vmatprep.mubr.f32.mxu0 0.0
    %1231 = vmatmul.mubr.f32.gmra.mxu0 %v1144
    %v1232 = vpop.f32.mrf.mxu0
    %v1233 = vadd.f32 %v1165, %v1232
    %v1234 = vpop.f32.mrf.mxu0
    %1235 = vmatprep.mubr.f32.mxu0 0.0
    %1236 = vmatmul.mubr.f32.gmra.mxu0 %v1145
    %v1237 = vpop.f32.mrf.mxu0
    %v1238 = vadd.f32 %v1165, %v1237
    %v1239 = vpop.f32.mrf.mxu0
    %1240 = vdwg.mxu0
    %v1241 = vadd.f32 %v1049, %v1233
    %v1242 = vadd.f32 %v1050, %v1238
    %v1243 = vsel %vm85, %v1241, 0.0
    %1244 = vadd.xlane.f32.xlu0 %v1243
    %v1245 = vpop.xlane.xlu0 %1244
    %v1246 = vsel %vm85, %v1242, 0.0
    %1247 = vadd.xlane.f32.xlu0 %v1246
    %v1248 = vpop.xlane.xlu0 %1247
    %v1249 = vmul.f32 %v1245, %v1018
    %v1250 = vmul.f32 %v1248, %v1018
    %v1251 = vsub.f32 %v1241, %v1249
    %v1252 = vsub.f32 %v1242, %v1250
    %v1253 = vmul.f32 %v1251, %v1251
    %v1254 = vmul.f32 %v1252, %v1252
    %v1255 = vsel %vm85, %v1253, 0.0
    %1256 = vadd.xlane.f32.xlu0 %v1255
    %v1257 = vpop.xlane.xlu0 %1256
    %v1258 = vsel %vm85, %v1254, 0.0
    %1259 = vadd.xlane.f32.xlu0 %v1258
    %v1260 = vpop.xlane.xlu0 %1259
    %v1261 = vmul.f32 %v1257, %v1018
    %v1262 = vmul.f32 %v1260, %v1018
    %v1263 = vadd.f32 %v1261, 1e-05
    %v1264 = vadd.f32 %v1262, 1e-05
    %v1265 = vrsqrt.pop %v1263
    %v1266 = vrsqrt.pop %v1264
    %v1267 = vmul.f32 %v1251, %v1265
    %v1268 = vmul.f32 %v1252, %v1266
    %v1269 = vlaneseq
    %v1270 = vshrl.u32 %v1269, 7
    %v1271 = vsub.s32 0, %v1270
    %v1272 = vrot.slane %v44, %v1271
    %v1273 = vmul.f32 %v1267, %v1272
    %v1274 = vmul.f32 %v1268, %v1272
    %v1275 = vlaneseq
    %v1276 = vshrl.u32 %v1275, 7
    %v1277 = vsub.s32 1, %v1276
    %v1278 = vrot.slane %v44, %v1277
    %v1279 = vadd.f32 %v1273, %v1278
    %v1280 = vadd.f32 %v1274, %v1278
    %v1281 = vadd.f32 %v1049, %v1279
    %v1282 = vadd.f32 %v1050, %v1280
    %1283 = vst.msk [vmem:[#allocation2] sm:$0xff] %vm85, %v1281
    %1284 = vst.msk [vmem:[#allocation2 + $0x8] sm:$0xff] %vm85, %v1282
    // Predicated region
    $region22: #{tpu_custom_call.1} parent=1 // pred_check
      _
    $region23: #{tpu_custom_call.1} parent=1 // pred_check_branch
      %1286 = sbr.rel (0) target = $region25
    $region24: #{tpu_custom_call.1} parent=1 // pred_region
      %s1288 = ssub.s32 256, 256
      %1289 = vsyncadd [#allocation3], %s1288
      %s1290 = sshll.u32 [#allocation2], 4
      %s1291 = int_to_ptr.vmem [resolvable:$true] %s1290
      %1296 = dma.vmem_to_hbm [thread:$0]  %s1291, 256, %s5, [#allocation3], 128, 128, 8
    $region25: #{tpu_custom_call.1} parent=1 // pred_fallthru
      _
    // Predicated region
    $region26: #{tpu_custom_call.1} parent=1 // pred_check
      _
    $region27: #{tpu_custom_call.1} parent=1 // pred_check_branch
      %1298 = sbr.rel (0) target = $region29
    $region28: #{tpu_custom_call.1} parent=1 // pred_region
      %1299 = dma.done [#allocation3], 256
    $region29: #{tpu_custom_call.1} parent=1 // pred_fallthru
      _
    %1300 = vsyncpa [#allocation3], 1

</llo_original>
